<compile_context>
chip_gen: v5e
topology: v5e:2x2
jax: 0.10.0
libtpu: 0.0.40
codegen_flags: <defaults>
</compile_context>

<pallas_src>
import math

import jax
import jax.numpy as jnp
from jax.experimental import pallas as pl
from jax.experimental.pallas import tpu as pltpu


_SQRT1_2 = 1.0 / math.sqrt(2.0)


def _erf(z):
    # Abramowitz & Stegun 7.1.26 polynomial (max abs err ~1.5e-7); the divide
    # is an approximate EUP reciprocal (adds ~1e-4 rel err, negligible next to
    # the bf16 matmul rounding).
    a = jnp.abs(z)
    t = pl.reciprocal(1.0 + 0.3275911 * a, approx=True)
    poly = ((((1.061405429 * t - 1.453152027) * t + 1.421413741) * t
             - 0.284496736) * t + 0.254829592) * t
    e = 1.0 - poly * jnp.exp(-a * a)
    return jnp.where(z >= 0, e, -e)


def _gelu_exact(x):
    # Matches PyTorch nn.GELU() default (erf-based GELU, not the tanh approx).
    return 0.5 * x * (1.0 + _erf(x * _SQRT1_2))


def _mlp_kernel(x_ref, w1_ref, b1_ref, w2_ref, b2_ref, o_ref, acc_ref):
    k = pl.program_id(1)

    @pl.when(k == 0)
    def _init():
        acc_ref[...] = jnp.zeros_like(acc_ref)

    # fc1 partial for this hidden tile: (tm, C) @ (C, tH) -> f32 on the MXU.
    h = jnp.dot(x_ref[...], w1_ref[...], preferred_element_type=jnp.float32)
    h = _gelu_exact(h + b1_ref[...])                      # bias + GELU in f32
    # fc2 partial: feed the MXU in the (bf16) weight dtype, accumulate f32.
    acc_ref[...] += jnp.dot(h.astype(w2_ref.dtype), w2_ref[...],
                            preferred_element_type=jnp.float32)

    @pl.when(k == pl.num_programs(1) - 1)
    def _finalize():
        o_ref[...] = (acc_ref[...] + b2_ref[...]).astype(o_ref.dtype)


def _pick_row_tile(m):
    # Big tiles fill the MXU M-dim, but guarantee >=2 row-grid steps whenever
    # M allows so "parallel" semantics can shard across v7x's 2 TensorCores.
    tm = 512
    while tm > 8 and tm >= m:
        tm //= 2
    return max(tm, 8)


def _pick_hidden_tile(h):
    # Tile the hidden dim only when it is large: largest multiple of 128 that
    # divides H, capped at 512.  Otherwise keep the full H (weights resident).
    if h <= 512 or h % 128 != 0:
        return h
    for t in (512, 384, 256, 128):
        if h % t == 0:
            return t
    return h


def prepare_mlp_params(w1, b1, w2, b2, *, param_dtype=jnp.bfloat16):
    """One-time parameter prep (hoisted out of the per-forward path).

    PyTorch-layout fc1/fc2 weights (out, in) -> transposed (in, out) bf16 for
    lane-dense MXU feeds; biases -> (1, n) f32.
    """
    H, C = w1.shape
    O = w2.shape[0]
    return (jnp.transpose(w1).astype(param_dtype),      # (C, H)
            b1.reshape(1, H).astype(jnp.float32),
            jnp.transpose(w2).astype(param_dtype),      # (H, O)
            b2.reshape(1, O).astype(jnp.float32))


def mlp_pallas(x, params):
    """x: (B, N, C); params from prepare_mlp_params."""
    w1t, b1r, w2t, b2r = params
    B, N, C = x.shape
    H = w1t.shape[1]
    O = w2t.shape[1]
    out_dtype = x.dtype
    in_dtype = w1t.dtype

    m = B * N
    x2 = x.reshape(m, C).astype(in_dtype)

    tm = _pick_row_tile(m)
    tH = _pick_hidden_tile(H)
    n_k = H // tH
    grid = (pl.cdiv(m, tm), n_k)
    weights_resident = (n_k == 1)          # constant index_map -> single-buffer

    # Explicit VMEM budget from the actual block footprint (+100% headroom),
    # capped well under v7x's 64 MiB physical VMEM.
    itm_in = jnp.dtype(in_dtype).itemsize
    itm_out = jnp.dtype(out_dtype).itemsize
    wbuf = 1 if weights_resident else 2
    footprint = (2 * tm * C * itm_in                      # x tile (double-buf)
                 + wbuf * (C * tH + tH * O) * itm_in      # weight tiles
                 + wbuf * tH * 4 + O * 4                  # biases (f32)
                 + 2 * tm * O * itm_out                   # out tile
                 + tm * O * 4                             # f32 accumulator
                 + tm * tH * 4)                           # h intermediate
    vmem_limit = int(min(64 * 1024 * 1024,
                         max(16 * 1024 * 1024, 2 * footprint)))

    def build(use_single_buffer):
        def wspec(shape, idx_map, resident):
            if use_single_buffer and resident:
                return pl.BlockSpec(shape, idx_map, pipeline_mode=pl.Buffered(1))
            return pl.BlockSpec(shape, idx_map)

        grid_spec = pltpu.PrefetchScalarGridSpec(
            num_scalar_prefetch=0,
            grid=grid,
            in_specs=[
                pl.BlockSpec((tm, C), lambda i, k: (i, 0)),            # x rows
                wspec((C, tH), lambda i, k: (0, k), weights_resident),  # fc1 W^T
                wspec((1, tH), lambda i, k: (0, k), weights_resident),  # fc1 b
                wspec((tH, O), lambda i, k: (k, 0), weights_resident),  # fc2 W^T
                wspec((1, O), lambda i, k: (0, 0), True),               # fc2 b
            ],
            out_specs=pl.BlockSpec((tm, O), lambda i, k: (i, 0)),
            scratch_shapes=[pltpu.VMEM((tm, O), jnp.float32)],
        )
        return pl.pallas_call(
            _mlp_kernel,
            out_shape=jax.ShapeDtypeStruct((m, O), out_dtype),
            grid_spec=grid_spec,
            compiler_params=pltpu.CompilerParams(
                dimension_semantics=("parallel", "arbitrary"),
                vmem_limit_bytes=vmem_limit),
        )

    try:
        out = build(True)(x2, w1t, b1r, w2t, b2r)
    except Exception:
        # Fallback for toolchains where Buffered(1) on a pallas_call BlockSpec
        # is rejected: identical kernel with default double-buffered specs.
        out = build(False)(x2, w1t, b1r, w2t, b2r)

    return out.reshape(B, N, O)


def mlp_reference(x, w1, b1, w2, b2):
    """Pure-JAX f32 mirror of the PyTorch forward (exact erf GELU, dropout p=0)."""
    h = jnp.dot(x, w1.T, precision="highest") + b1
    h = jax.nn.gelu(h, approximate=False)
    return jnp.dot(h, w2.T, precision="highest") + b2


if __name__ == "__main__":
    # Small shapes consistent with the TNT Mlp; feature dims are multiples of
    # 128 so all loads/stores are full-lane.
    B, N = 2, 8
    in_features = 128
    hidden_features = 256
    out_features = in_features

    key = jax.random.PRNGKey(0)
    kx, kw1, kb1, kw2, kb2 = jax.random.split(key, 5)
    x = jax.random.normal(kx, (B, N, in_features), dtype=jnp.float32)
    # nn.Linear stores weight as (out_features, in_features), like PyTorch.
    w1 = jax.random.normal(kw1, (hidden_features, in_features), dtype=jnp.float32) * 0.1
    b1 = jax.random.normal(kb1, (hidden_features,), dtype=jnp.float32) * 0.1
    w2 = jax.random.normal(kw2, (out_features, hidden_features), dtype=jnp.float32) * 0.1
    b2 = jax.random.normal(kb2, (out_features,), dtype=jnp.float32) * 0.1

    params = prepare_mlp_params(w1, b1, w2, b2)   # one-time prep (cached in a real model)
    out = mlp_pallas(x, params)
    out = jax.block_until_ready(out)

    ref = mlp_reference(x, w1, b1, w2, b2)
    assert out.shape == (B, N, out_features)
    # Tolerance covers bf16 MXU operands (f32 accumulate), the ~1.5e-7 erf
    # polynomial, and the approximate EUP reciprocal.
    assert jnp.allclose(out, ref, atol=3e-2, rtol=3e-2), "mismatch vs reference"

    # TODO(synk): Dropout (p=0.0 by default) is the identity and is omitted; a
    # nonzero train-time dropout would need pltpu.prng_seed/prng_random_bits.
    print("KERNEL_OK")
</pallas_src>

<mosaic_0001>
module attributes {stable_mosaic.version = 11 : i64} {
  func.func @_mlp_kernel(%arg0: i32, %arg1: i32, %arg2: memref<8x128xbf16, #tpu.memory_space<vmem>>, %arg3: memref<128x256xbf16, #tpu.memory_space<vmem>>, %arg4: memref<1x256xf32, #tpu.memory_space<vmem>>, %arg5: memref<256x128xbf16, #tpu.memory_space<vmem>>, %arg6: memref<1x128xf32, #tpu.memory_space<vmem>>, %arg7: memref<8x128xf32, #tpu.memory_space<vmem>>, %arg8: memref<8x128xf32, #tpu.memory_space<vmem>>) attributes {dimension_semantics = [#tpu.dimension_semantics<parallel>, #tpu.dimension_semantics<arbitrary>], iteration_bounds = array<i64: 2, 1>, scalar_prefetch = 0 : i64, scratch_operands = 1 : i64, tpu.core_type = #tpu.core_type<tc>, window_params = [{transform_indices = @transform_0, window_bounds = array<i64: 8, 128>}, {pipeline_mode = #tpu.pipeline_mode<synchronous>, transform_indices = @transform_1, window_bounds = array<i64: 128, 256>}, {pipeline_mode = #tpu.pipeline_mode<synchronous>, transform_indices = @transform_2, window_bounds = array<i64: 1, 256>}, {pipeline_mode = #tpu.pipeline_mode<synchronous>, transform_indices = @transform_3, window_bounds = array<i64: 256, 128>}, {pipeline_mode = #tpu.pipeline_mode<synchronous>, transform_indices = @transform_4, window_bounds = array<i64: 1, 128>}, {transform_indices = @transform_5, window_bounds = array<i64: 8, 128>}]} {
    %c0_i32 = arith.constant 0 : i32
    %0 = arith.cmpi eq, %arg1, %c0_i32 : i32
    %1 = arith.extui %0 : i1 to i32
    %c0_i32_0 = arith.constant 0 : i32
    %2 = arith.cmpi ne, %1, %c0_i32_0 : i32
    scf.if %2 {
      %cst_29 = arith.constant 0.000000e+00 : f32
      %57 = vector.broadcast %cst_29 : f32 to vector<8x128xf32>
      %c0_30 = arith.constant 0 : index
      %c0_31 = arith.constant 0 : index
      %58 = vector.load %arg8[%c0_30, %c0_31] : memref<8x128xf32, #tpu.memory_space<vmem>>, vector<8x128xf32>
      tpu.vector_store %arg8[%c0_30, %c0_31], %57 {strides = array<i32>} : memref<8x128xf32, #tpu.memory_space<vmem>>, vector<8x128xf32>,
    } else {
    }
    %c0 = arith.constant 0 : index
    %c0_1 = arith.constant 0 : index
    %3 = vector.load %arg2[%c0, %c0_1] : memref<8x128xbf16, #tpu.memory_space<vmem>>, vector<8x128xbf16>
    %c0_2 = arith.constant 0 : index
    %c0_3 = arith.constant 0 : index
    %4 = vector.load %arg3[%c0_2, %c0_3] : memref<128x256xbf16, #tpu.memory_space<vmem>>, vector<128x256xbf16>
    %cst = arith.constant dense<0.000000e+00> : vector<8x256xf32>
    %5 = tpu.matmul %3, %4, %cst {dimension_numbers = #tpu.dot_dimension_numbers<[1], [0], [0], [1], [0, 0, 1, 1], [], []>} : vector<8x128xbf16>, vector<128x256xbf16>, vector<8x256xf32> -> vector<8x256xf32>
    %c0_4 = arith.constant 0 : index
    %c0_5 = arith.constant 0 : index
    %6 = vector.load %arg4[%c0_4, %c0_5] : memref<1x256xf32, #tpu.memory_space<vmem>>, vector<1x256xf32>
    %7 = vector.broadcast %6 : vector<1x256xf32> to vector<8x256xf32>
    %8 = arith.addf %5, %7 : vector<8x256xf32>
    %cst_6 = arith.constant 5.000000e-01 : f32
    %9 = vector.broadcast %cst_6 : f32 to vector<8x256xf32>
    %10 = arith.mulf %9, %8 : vector<8x256xf32>
    %cst_7 = arith.constant 0.707106769 : f32
    %11 = vector.broadcast %cst_7 : f32 to vector<8x256xf32>
    %12 = arith.mulf %8, %11 : vector<8x256xf32>
    %13 = math.absf %12 : vector<8x256xf32>
    %cst_8 = arith.constant 0.327591091 : f32
    %14 = vector.broadcast %cst_8 : f32 to vector<8x256xf32>
    %15 = arith.mulf %14, %13 : vector<8x256xf32>
    %cst_9 = arith.constant 1.000000e+00 : f32
    %16 = vector.broadcast %cst_9 : f32 to vector<8x256xf32>
    %17 = arith.addf %16, %15 : vector<8x256xf32>
    %18 = tpu.reciprocal %17 {approx = true} : vector<8x256xf32> -> vector<8x256xf32>
    %cst_10 = arith.constant 1.06140542 : f32
    %19 = vector.broadcast %cst_10 : f32 to vector<8x256xf32>
    %20 = arith.mulf %19, %18 : vector<8x256xf32>
    %cst_11 = arith.constant 1.45315206 : f32
    %21 = vector.broadcast %cst_11 : f32 to vector<8x256xf32>
    %22 = arith.subf %20, %21 : vector<8x256xf32>
    %23 = arith.mulf %22, %18 : vector<8x256xf32>
    %cst_12 = arith.constant 1.42141378 : f32
    %24 = vector.broadcast %cst_12 : f32 to vector<8x256xf32>
    %25 = arith.addf %23, %24 : vector<8x256xf32>
    %26 = arith.mulf %25, %18 : vector<8x256xf32>
    %cst_13 = arith.constant 0.284496725 : f32
    %27 = vector.broadcast %cst_13 : f32 to vector<8x256xf32>
    %28 = arith.subf %26, %27 : vector<8x256xf32>
    %29 = arith.mulf %28, %18 : vector<8x256xf32>
    %cst_14 = arith.constant 0.254829586 : f32
    %30 = vector.broadcast %cst_14 : f32 to vector<8x256xf32>
    %31 = arith.addf %29, %30 : vector<8x256xf32>
    %32 = arith.mulf %31, %18 : vector<8x256xf32>
    %cst_15 = arith.constant 0.000000e+00 : f32
    %33 = vector.broadcast %cst_15 : f32 to vector<8x256xf32>
    %34 = arith.subf %33, %13 : vector<8x256xf32>
    %35 = arith.mulf %34, %13 : vector<8x256xf32>
    %36 = math.exp %35 : vector<8x256xf32>
    %37 = arith.mulf %32, %36 : vector<8x256xf32>
    %cst_16 = arith.constant 1.000000e+00 : f32
    %38 = vector.broadcast %cst_16 : f32 to vector<8x256xf32>
    %39 = arith.subf %38, %37 : vector<8x256xf32>
    %cst_17 = arith.constant 0.000000e+00 : f32
    %40 = vector.broadcast %cst_17 : f32 to vector<8x256xf32>
    %41 = arith.cmpf oge, %12, %40 : vector<8x256xf32>
    %cst_18 = arith.constant 0.000000e+00 : f32
    %42 = vector.broadcast %cst_18 : f32 to vector<8x256xf32>
    %43 = arith.subf %42, %39 : vector<8x256xf32>
    %44 = arith.select %41, %39, %43 : vector<8x256xi1>, vector<8x256xf32>
    %cst_19 = arith.constant 1.000000e+00 : f32
    %45 = vector.broadcast %cst_19 : f32 to vector<8x256xf32>
    %46 = arith.addf %45, %44 : vector<8x256xf32>
    %47 = arith.mulf %10, %46 : vector<8x256xf32>
    %c0_20 = arith.constant 0 : index
    %c0_21 = arith.constant 0 : index
    %48 = vector.load %arg8[%c0_20, %c0_21] : memref<8x128xf32, #tpu.memory_space<vmem>>, vector<8x128xf32>
    %49 = arith.truncf %47 : vector<8x256xf32> to vector<8x256xbf16>
    %c0_22 = arith.constant 0 : index
    %c0_23 = arith.constant 0 : index
    %50 = vector.load %arg5[%c0_22, %c0_23] : memref<256x128xbf16, #tpu.memory_space<vmem>>, vector<256x128xbf16>
    %cst_24 = arith.constant dense<0.000000e+00> : vector<8x128xf32>
    %51 = tpu.matmul %49, %50, %cst_24 {dimension_numbers = #tpu.dot_dimension_numbers<[1], [0], [0], [1], [0, 0, 1, 1], [], []>} : vector<8x256xbf16>, vector<256x128xbf16>, vector<8x128xf32> -> vector<8x128xf32>
    %52 = arith.addf %48, %51 : vector<8x128xf32>
    %c0_25 = arith.constant 0 : index
    %c0_26 = arith.constant 0 : index
    %53 = vector.load %arg8[%c0_25, %c0_26] : memref<8x128xf32, #tpu.memory_space<vmem>>, vector<8x128xf32>
    tpu.vector_store %arg8[%c0_25, %c0_26], %52 {strides = array<i32>} : memref<8x128xf32, #tpu.memory_space<vmem>>, vector<8x128xf32>,
    %c0_i32_27 = arith.constant 0 : i32
    %54 = arith.cmpi eq, %arg1, %c0_i32_27 : i32
    %55 = arith.extui %54 : i1 to i32
    %c0_i32_28 = arith.constant 0 : i32
    %56 = arith.cmpi ne, %55, %c0_i32_28 : i32
    scf.if %56 {
      %c0_29 = arith.constant 0 : index
      %c0_30 = arith.constant 0 : index
      %57 = vector.load %arg8[%c0_29, %c0_30] : memref<8x128xf32, #tpu.memory_space<vmem>>, vector<8x128xf32>
      %c0_31 = arith.constant 0 : index
      %c0_32 = arith.constant 0 : index
      %58 = vector.load %arg6[%c0_31, %c0_32] : memref<1x128xf32, #tpu.memory_space<vmem>>, vector<1x128xf32>
      %59 = vector.broadcast %58 : vector<1x128xf32> to vector<8x128xf32>
      %60 = arith.addf %57, %59 : vector<8x128xf32>
      %c0_33 = arith.constant 0 : index
      %c0_34 = arith.constant 0 : index
      %61 = vector.load %arg7[%c0_33, %c0_34] : memref<8x128xf32, #tpu.memory_space<vmem>>, vector<8x128xf32>
      tpu.vector_store %arg7[%c0_33, %c0_34], %60 {strides = array<i32>} : memref<8x128xf32, #tpu.memory_space<vmem>>, vector<8x128xf32>,
    } else {
    }
    return
  }
  func.func @transform_0(%arg0: i32, %arg1: i32) -> (i32, i32) {
    %c0_i32 = arith.constant 0 : i32
    %c0_i32_0 = arith.constant 0 : i32
    return %arg0, %c0_i32 : i32, i32
  }
  func.func @transform_1(%arg0: i32, %arg1: i32) -> (i32, i32) {
    %c0_i32 = arith.constant 0 : i32
    %c0_i32_0 = arith.constant 0 : i32
    return %c0_i32, %arg1 : i32, i32
  }
  func.func @transform_2(%arg0: i32, %arg1: i32) -> (i32, i32) {
    %c0_i32 = arith.constant 0 : i32
    %c0_i32_0 = arith.constant 0 : i32
    return %c0_i32, %arg1 : i32, i32
  }
  func.func @transform_3(%arg0: i32, %arg1: i32) -> (i32, i32) {
    %c0_i32 = arith.constant 0 : i32
    %c0_i32_0 = arith.constant 0 : i32
    return %arg1, %c0_i32 : i32, i32
  }
  func.func @transform_4(%arg0: i32, %arg1: i32) -> (i32, i32) {
    %c0_i32 = arith.constant 0 : i32
    %c0_i32_0 = arith.constant 0 : i32
    %c0_i32_1 = arith.constant 0 : i32
    return %c0_i32, %c0_i32_0 : i32, i32
  }
  func.func @transform_5(%arg0: i32, %arg1: i32) -> (i32, i32) {
    %c0_i32 = arith.constant 0 : i32
    %c0_i32_0 = arith.constant 0 : i32
    return %arg0, %c0_i32 : i32, i32
  }
}

module attributes {stable_mosaic.version = 11 : i64} {
  func.func @_mlp_kernel(%arg0: i32, %arg1: i32, %arg2: memref<8x128xbf16, #tpu.memory_space<vmem>>, %arg3: memref<128x256xbf16, #tpu.memory_space<vmem>>, %arg4: memref<1x256xf32, #tpu.memory_space<vmem>>, %arg5: memref<256x128xbf16, #tpu.memory_space<vmem>>, %arg6: memref<1x128xf32, #tpu.memory_space<vmem>>, %arg7: memref<8x128xf32, #tpu.memory_space<vmem>>, %arg8: memref<8x128xf32, #tpu.memory_space<vmem>>) attributes {dimension_semantics = [#tpu.dimension_semantics<parallel>, #tpu.dimension_semantics<arbitrary>], iteration_bounds = array<i64: 2, 1>, scalar_prefetch = 0 : i64, scratch_operands = 1 : i64, tpu.core_type = #tpu.core_type<tc>, window_params = [{transform_indices = @transform_0, window_bounds = array<i64: 8, 128>}, {transform_indices = @transform_1, window_bounds = array<i64: 128, 256>}, {transform_indices = @transform_2, window_bounds = array<i64: 1, 256>}, {transform_indices = @transform_3, window_bounds = array<i64: 256, 128>}, {pipeline_mode = #tpu.pipeline_mode<synchronous>, transform_indices = @transform_4, window_bounds = array<i64: 1, 128>}, {transform_indices = @transform_5, window_bounds = array<i64: 8, 128>}]} {
    %c0_i32 = arith.constant 0 : i32
    %0 = arith.cmpi eq, %arg1, %c0_i32 : i32
    %1 = arith.extui %0 : i1 to i32
    %c0_i32_0 = arith.constant 0 : i32
    %2 = arith.cmpi ne, %1, %c0_i32_0 : i32
    scf.if %2 {
      %cst_29 = arith.constant 0.000000e+00 : f32
      %57 = vector.broadcast %cst_29 : f32 to vector<8x128xf32>
      %c0_30 = arith.constant 0 : index
      %c0_31 = arith.constant 0 : index
      %58 = vector.load %arg8[%c0_30, %c0_31] : memref<8x128xf32, #tpu.memory_space<vmem>>, vector<8x128xf32>
      tpu.vector_store %arg8[%c0_30, %c0_31], %57 {strides = array<i32>} : memref<8x128xf32, #tpu.memory_space<vmem>>, vector<8x128xf32>,
    } else {
    }
    %c0 = arith.constant 0 : index
    %c0_1 = arith.constant 0 : index
    %3 = vector.load %arg2[%c0, %c0_1] : memref<8x128xbf16, #tpu.memory_space<vmem>>, vector<8x128xbf16>
    %c0_2 = arith.constant 0 : index
    %c0_3 = arith.constant 0 : index
    %4 = vector.load %arg3[%c0_2, %c0_3] : memref<128x256xbf16, #tpu.memory_space<vmem>>, vector<128x256xbf16>
    %cst = arith.constant dense<0.000000e+00> : vector<8x256xf32>
    %5 = tpu.matmul %3, %4, %cst {dimension_numbers = #tpu.dot_dimension_numbers<[1], [0], [0], [1], [0, 0, 1, 1], [], []>} : vector<8x128xbf16>, vector<128x256xbf16>, vector<8x256xf32> -> vector<8x256xf32>
    %c0_4 = arith.constant 0 : index
    %c0_5 = arith.constant 0 : index
    %6 = vector.load %arg4[%c0_4, %c0_5] : memref<1x256xf32, #tpu.memory_space<vmem>>, vector<1x256xf32>
    %7 = vector.broadcast %6 : vector<1x256xf32> to vector<8x256xf32>
    %8 = arith.addf %5, %7 : vector<8x256xf32>
    %cst_6 = arith.constant 5.000000e-01 : f32
    %9 = vector.broadcast %cst_6 : f32 to vector<8x256xf32>
    %10 = arith.mulf %9, %8 : vector<8x256xf32>
    %cst_7 = arith.constant 0.707106769 : f32
    %11 = vector.broadcast %cst_7 : f32 to vector<8x256xf32>
    %12 = arith.mulf %8, %11 : vector<8x256xf32>
    %13 = math.absf %12 : vector<8x256xf32>
    %cst_8 = arith.constant 0.327591091 : f32
    %14 = vector.broadcast %cst_8 : f32 to vector<8x256xf32>
    %15 = arith.mulf %14, %13 : vector<8x256xf32>
    %cst_9 = arith.constant 1.000000e+00 : f32
    %16 = vector.broadcast %cst_9 : f32 to vector<8x256xf32>
    %17 = arith.addf %16, %15 : vector<8x256xf32>
    %18 = tpu.reciprocal %17 {approx = true} : vector<8x256xf32> -> vector<8x256xf32>
    %cst_10 = arith.constant 1.06140542 : f32
    %19 = vector.broadcast %cst_10 : f32 to vector<8x256xf32>
    %20 = arith.mulf %19, %18 : vector<8x256xf32>
    %cst_11 = arith.constant 1.45315206 : f32
    %21 = vector.broadcast %cst_11 : f32 to vector<8x256xf32>
    %22 = arith.subf %20, %21 : vector<8x256xf32>
    %23 = arith.mulf %22, %18 : vector<8x256xf32>
    %cst_12 = arith.constant 1.42141378 : f32
    %24 = vector.broadcast %cst_12 : f32 to vector<8x256xf32>
    %25 = arith.addf %23, %24 : vector<8x256xf32>
    %26 = arith.mulf %25, %18 : vector<8x256xf32>
    %cst_13 = arith.constant 0.284496725 : f32
    %27 = vector.broadcast %cst_13 : f32 to vector<8x256xf32>
    %28 = arith.subf %26, %27 : vector<8x256xf32>
    %29 = arith.mulf %28, %18 : vector<8x256xf32>
    %cst_14 = arith.constant 0.254829586 : f32
    %30 = vector.broadcast %cst_14 : f32 to vector<8x256xf32>
    %31 = arith.addf %29, %30 : vector<8x256xf32>
    %32 = arith.mulf %31, %18 : vector<8x256xf32>
    %cst_15 = arith.constant 0.000000e+00 : f32
    %33 = vector.broadcast %cst_15 : f32 to vector<8x256xf32>
    %34 = arith.subf %33, %13 : vector<8x256xf32>
    %35 = arith.mulf %34, %13 : vector<8x256xf32>
    %36 = math.exp %35 : vector<8x256xf32>
    %37 = arith.mulf %32, %36 : vector<8x256xf32>
    %cst_16 = arith.constant 1.000000e+00 : f32
    %38 = vector.broadcast %cst_16 : f32 to vector<8x256xf32>
    %39 = arith.subf %38, %37 : vector<8x256xf32>
    %cst_17 = arith.constant 0.000000e+00 : f32
    %40 = vector.broadcast %cst_17 : f32 to vector<8x256xf32>
    %41 = arith.cmpf oge, %12, %40 : vector<8x256xf32>
    %cst_18 = arith.constant 0.000000e+00 : f32
    %42 = vector.broadcast %cst_18 : f32 to vector<8x256xf32>
    %43 = arith.subf %42, %39 : vector<8x256xf32>
    %44 = arith.select %41, %39, %43 : vector<8x256xi1>, vector<8x256xf32>
    %cst_19 = arith.constant 1.000000e+00 : f32
    %45 = vector.broadcast %cst_19 : f32 to vector<8x256xf32>
    %46 = arith.addf %45, %44 : vector<8x256xf32>
    %47 = arith.mulf %10, %46 : vector<8x256xf32>
    %c0_20 = arith.constant 0 : index
    %c0_21 = arith.constant 0 : index
    %48 = vector.load %arg8[%c0_20, %c0_21] : memref<8x128xf32, #tpu.memory_space<vmem>>, vector<8x128xf32>
    %49 = arith.truncf %47 : vector<8x256xf32> to vector<8x256xbf16>
    %c0_22 = arith.constant 0 : index
    %c0_23 = arith.constant 0 : index
    %50 = vector.load %arg5[%c0_22, %c0_23] : memref<256x128xbf16, #tpu.memory_space<vmem>>, vector<256x128xbf16>
    %cst_24 = arith.constant dense<0.000000e+00> : vector<8x128xf32>
    %51 = tpu.matmul %49, %50, %cst_24 {dimension_numbers = #tpu.dot_dimension_numbers<[1], [0], [0], [1], [0, 0, 1, 1], [], []>} : vector<8x256xbf16>, vector<256x128xbf16>, vector<8x128xf32> -> vector<8x128xf32>
    %52 = arith.addf %48, %51 : vector<8x128xf32>
    %c0_25 = arith.constant 0 : index
    %c0_26 = arith.constant 0 : index
    %53 = vector.load %arg8[%c0_25, %c0_26] : memref<8x128xf32, #tpu.memory_space<vmem>>, vector<8x128xf32>
    tpu.vector_store %arg8[%c0_25, %c0_26], %52 {strides = array<i32>} : memref<8x128xf32, #tpu.memory_space<vmem>>, vector<8x128xf32>,
    %c0_i32_27 = arith.constant 0 : i32
    %54 = arith.cmpi eq, %arg1, %c0_i32_27 : i32
    %55 = arith.extui %54 : i1 to i32
    %c0_i32_28 = arith.constant 0 : i32
    %56 = arith.cmpi ne, %55, %c0_i32_28 : i32
    scf.if %56 {
      %c0_29 = arith.constant 0 : index
      %c0_30 = arith.constant 0 : index
      %57 = vector.load %arg8[%c0_29, %c0_30] : memref<8x128xf32, #tpu.memory_space<vmem>>, vector<8x128xf32>
      %c0_31 = arith.constant 0 : index
      %c0_32 = arith.constant 0 : index
      %58 = vector.load %arg6[%c0_31, %c0_32] : memref<1x128xf32, #tpu.memory_space<vmem>>, vector<1x128xf32>
      %59 = vector.broadcast %58 : vector<1x128xf32> to vector<8x128xf32>
      %60 = arith.addf %57, %59 : vector<8x128xf32>
      %c0_33 = arith.constant 0 : index
      %c0_34 = arith.constant 0 : index
      %61 = vector.load %arg7[%c0_33, %c0_34] : memref<8x128xf32, #tpu.memory_space<vmem>>, vector<8x128xf32>
      tpu.vector_store %arg7[%c0_33, %c0_34], %60 {strides = array<i32>} : memref<8x128xf32, #tpu.memory_space<vmem>>, vector<8x128xf32>,
    } else {
    }
    return
  }
  func.func @transform_0(%arg0: i32, %arg1: i32) -> (i32, i32) {
    %c0_i32 = arith.constant 0 : i32
    %c0_i32_0 = arith.constant 0 : i32
    return %arg0, %c0_i32 : i32, i32
  }
  func.func @transform_1(%arg0: i32, %arg1: i32) -> (i32, i32) {
    %c0_i32 = arith.constant 0 : i32
    %c0_i32_0 = arith.constant 0 : i32
    return %c0_i32, %arg1 : i32, i32
  }
  func.func @transform_2(%arg0: i32, %arg1: i32) -> (i32, i32) {
    %c0_i32 = arith.constant 0 : i32
    %c0_i32_0 = arith.constant 0 : i32
    return %c0_i32, %arg1 : i32, i32
  }
  func.func @transform_3(%arg0: i32, %arg1: i32) -> (i32, i32) {
    %c0_i32 = arith.constant 0 : i32
    %c0_i32_0 = arith.constant 0 : i32
    return %arg1, %c0_i32 : i32, i32
  }
  func.func @transform_4(%arg0: i32, %arg1: i32) -> (i32, i32) {
    %c0_i32 = arith.constant 0 : i32
    %c0_i32_0 = arith.constant 0 : i32
    %c0_i32_1 = arith.constant 0 : i32
    return %c0_i32, %c0_i32_0 : i32, i32
  }
  func.func @transform_5(%arg0: i32, %arg1: i32) -> (i32, i32) {
    %c0_i32 = arith.constant 0 : i32
    %c0_i32_0 = arith.constant 0 : i32
    return %arg0, %c0_i32 : i32, i32
  }
}

</mosaic_0001>

<llo_original>
// kernel: tpu_custom_call.1
$region0: #{tpu_custom_call.1}
  #allocation0 [shape = 'u32[]', space=smem, size = 0x4, offset = 0x4, fixed_abs, tag = 'smem constant byte address 0x4 - core index']
  #allocation1 [shape = 'u32[72,128]{1,0:T(1,128)}', space=vmem, size = 0x9000, scoped, tag = 'internal scratch']
  #allocation2 [shape = 'f32[8,128]{1,0:T(8,128)}', space=vmem, size = 0x1000, scoped, tag = 'scratch operand']
  %s0 = inlined_call_operand.hbm [shape: bf16[16,128], index: 0, kind: input, shape index: {}]
  %s1 = inlined_call_operand.hbm [shape: bf16[128,256], index: 1, kind: input, shape index: {}]
  %s2 = inlined_call_operand.hbm [shape: f32[1,256], index: 2, kind: input, shape index: {}]
  %s3 = inlined_call_operand.hbm [shape: bf16[256,128], index: 3, kind: input, shape index: {}]
  %s4 = inlined_call_operand.vmem [shape: f32[1,128], index: 4, kind: input, shape index: {}]
  %s5 = inlined_call_operand.hbm [shape: f32[16,128], index: 5, kind: output, shape index: {}]
  %s6 = sld [smem:[#allocation0]]
  $region77: #{tpu_custom_call.1} parent=0
    _
  %s8 = ssub.s32 1, %s6
  %s9 = scalar_select 0, %s8, %s6
  $region1: #{tpu_custom_call.1} parent=0
    #allocation3 [shape = 'u8[4096]{0}', space=vmem, size = 0x1000, scoped, tag = 'input window, operand 0']
    #allocation4 [shape = 's32[2]{0}', space=sflag, size = 0x8, scoped, tag = 'scoped memory for tpu_custom_call.1']
    #allocation5 [shape = 's32[2]{0}', space=sflag, size = 0x8, scoped, tag = 'scoped memory for tpu_custom_call.1']
    #allocation6 [shape = 'u8[65536]{0}', space=vmem, size = 0x10000, scoped, tag = 'input window, operand 1, single buffered']
    #allocation7 [shape = 's32[1]{0}', space=sflag, size = 0x4, scoped, tag = 'scoped memory for tpu_custom_call.1']
    #allocation8 [shape = 'u8[1024]{0}', space=vmem, size = 0x400, scoped, tag = 'input window, operand 2, single buffered']
    #allocation9 [shape = 'u8[65536]{0}', space=vmem, size = 0x10000, scoped, tag = 'input window, operand 3, single buffered']
    #allocation10 [shape = 's32[1]{0}', space=sflag, size = 0x4, scoped, tag = 'scoped memory for tpu_custom_call.1']
    #allocation11 [shape = 'u8[8192]{0}', space=vmem, size = 0x2000, scoped, tag = 'output window, operand 0']
    %10 = vsyncpa [#allocation4], 0
    %s11 = scalar_lea.sflag [#allocation4], 1
    %12 = vsyncpa %s11, 0
    %13 = vsyncpa [#allocation7], 0
    %14 = vsyncpa [#allocation10], 0
    %15 = vsyncpa [#allocation5], 0
    %s16 = scalar_lea.sflag [#allocation5], 1
    %17 = vsyncpa %s16, 0
    loop: start=0, step=1, limit=4
    $region2: #{tpu_custom_call.1} parent=1 // loop_pre_header
      _
    $region3: #{tpu_custom_call.1} parent=1 // loop_header
      %s19 = sphi 0, %s23
      %p20 = scmp.ge.s32.totalorder %s19, 4
      %s26 = sphi 0, %s38
      %s27 = sphi 0, %s34
      %s28 = sphi 0, %s26
      %s29 = sphi 0, %s27
      %s30 = sphi 0, %s28
      %s31 = sphi 0, %s29
      %s41 = sphi 0, %s43
      %s44 = sphi 0, %s41
      %s45 = sphi 0, %s44
      %s61 = sphi 0, %s45
      %s67 = sphi 0, %s69
      %s70 = sphi 0, %s67
      %s71 = sphi 0, %s70
      %s87 = sphi 0, %s71
      %s93 = sphi 0, %s95
      %s96 = sphi 0, %s93
      %s97 = sphi 0, %s96
      %s113 = sphi 0, %s97
      %s119 = sphi 0, %s121
      %s122 = sphi 0, %s119
      %s123 = sphi 0, %s122
      %s139 = sphi 0, %s123
      %s143 = sphi 0, %s143
      %s145 = sphi 0, %s143
      %s146 = sphi 0, %s145
      %s160 = sphi 0, %s146
      %s166 = sphi 0, %s168
      %s169 = sphi 0, %s166
      %s170 = sphi 0, %s169
      %s186 = sphi 0, %s170
    $region4: #{tpu_custom_call.1} parent=1 // loop_header_branch
      %22 = sbr.rel (%p20) target = $region8
    $region5: #{tpu_custom_call.1} parent=1 // loop_body
      %s24 = ssub.s32 %s19, 1
      %s25 = ssub.s32 %s19, 2
      %s32 = sadd.s32 1, %s27
      %p33 = scmp.ge.s32.totalorder %s32, 1
      %s34 = scalar_select %p33, 0, %s32
      %s35 = sadd.s32 1, %s26
      %s36 = scalar_select %p33, %s35, %s26
      %p37 = scmp.ge.s32.totalorder %s36, 2
      %s38 = scalar_select %p37, 0, %s36
      %s39 = ssub.s32 %s26, %s38
      %p40 = scmp.eq.s32.totalorder %s39, 0
      %s42 = sadd.s32 %s41, 1
      %s43 = scalar_select %p40, %s41, %s42
      %p46 = pneg %p40
      %p47 = scmp.eq.s32.totalorder %s19, 1
      %p48 = por %p46, %p47
      %p49 = scmp.ne.s32.totalorder %s41, %s44
      %p50 = scmp.eq.s32.totalorder %s19, 0
      %p51 = por %p49, %p50
      %p52 = scmp.ne.s32.totalorder %s41, %s44
      %p53 = scmp.eq.s32.totalorder %s24, 1
      %p54 = por %p52, %p53
      %p55 = scmp.ne.s32.totalorder %s44, %s45
      %p56 = scmp.eq.s32.totalorder %s24, 0
      %p57 = por %p55, %p56
      %p58 = scmp.ne.s32.totalorder %s44, %s45
      %p59 = scmp.eq.s32.totalorder %s25, 1
      %p60 = por %p58, %p59
      %p62 = scmp.ne.s32.totalorder %s45, %s61
      %p63 = scmp.eq.s32.totalorder %s25, 0
      %p64 = por %p62, %p63
      %s65 = ssub.s32 %s27, %s34
      %p66 = scmp.eq.s32.totalorder %s65, 0
      %s68 = sadd.s32 %s67, 1
      %s69 = scalar_select %p66, %s67, %s68
      %p72 = pneg %p66
      %p73 = scmp.eq.s32.totalorder %s19, 1
      %p74 = por %p72, %p73
      %p75 = scmp.ne.s32.totalorder %s67, %s70
      %p76 = scmp.eq.s32.totalorder %s19, 0
      %p77 = por %p75, %p76
      %p78 = scmp.ne.s32.totalorder %s67, %s70
      %p79 = scmp.eq.s32.totalorder %s24, 1
      %p80 = por %p78, %p79
      %p81 = scmp.ne.s32.totalorder %s70, %s71
      %p82 = scmp.eq.s32.totalorder %s24, 0
      %p83 = por %p81, %p82
      %p84 = scmp.ne.s32.totalorder %s70, %s71
      %p85 = scmp.eq.s32.totalorder %s25, 1
      %p86 = por %p84, %p85
      %p88 = scmp.ne.s32.totalorder %s71, %s87
      %p89 = scmp.eq.s32.totalorder %s25, 0
      %p90 = por %p88, %p89
      %s91 = ssub.s32 %s27, %s34
      %p92 = scmp.eq.s32.totalorder %s91, 0
      %s94 = sadd.s32 %s93, 1
      %s95 = scalar_select %p92, %s93, %s94
      %p98 = pneg %p92
      %p99 = scmp.eq.s32.totalorder %s19, 1
      %p100 = por %p98, %p99
      %p101 = scmp.ne.s32.totalorder %s93, %s96
      %p102 = scmp.eq.s32.totalorder %s19, 0
      %p103 = por %p101, %p102
      %p104 = scmp.ne.s32.totalorder %s93, %s96
      %p105 = scmp.eq.s32.totalorder %s24, 1
      %p106 = por %p104, %p105
      %p107 = scmp.ne.s32.totalorder %s96, %s97
      %p108 = scmp.eq.s32.totalorder %s24, 0
      %p109 = por %p107, %p108
      %p110 = scmp.ne.s32.totalorder %s96, %s97
      %p111 = scmp.eq.s32.totalorder %s25, 1
      %p112 = por %p110, %p111
      %p114 = scmp.ne.s32.totalorder %s97, %s113
      %p115 = scmp.eq.s32.totalorder %s25, 0
      %p116 = por %p114, %p115
      %s117 = ssub.s32 %s27, %s34
      %p118 = scmp.eq.s32.totalorder %s117, 0
      %s120 = sadd.s32 %s119, 1
      %s121 = scalar_select %p118, %s119, %s120
      %p124 = pneg %p118
      %p125 = scmp.eq.s32.totalorder %s19, 1
      %p126 = por %p124, %p125
      %p127 = scmp.ne.s32.totalorder %s119, %s122
      %p128 = scmp.eq.s32.totalorder %s19, 0
      %p129 = por %p127, %p128
      %p130 = scmp.ne.s32.totalorder %s119, %s122
      %p131 = scmp.eq.s32.totalorder %s24, 1
      %p132 = por %p130, %p131
      %p133 = scmp.ne.s32.totalorder %s122, %s123
      %p134 = scmp.eq.s32.totalorder %s24, 0
      %p135 = por %p133, %p134
      %p136 = scmp.ne.s32.totalorder %s122, %s123
      %p137 = scmp.eq.s32.totalorder %s25, 1
      %p138 = por %p136, %p137
      %p140 = scmp.ne.s32.totalorder %s123, %s139
      %p141 = scmp.eq.s32.totalorder %s25, 0
      %p142 = por %p140, %p141
      %s144 = sadd.s32 %s143, 1
      %p147 = scmp.eq.s32.totalorder %s19, 1
      %p148 = scmp.ne.s32.totalorder %s143, %s145
      %p149 = scmp.eq.s32.totalorder %s19, 0
      %p150 = por %p148, %p149
      %p151 = scmp.ne.s32.totalorder %s143, %s145
      %p152 = scmp.eq.s32.totalorder %s24, 1
      %p153 = por %p151, %p152
      %p154 = scmp.ne.s32.totalorder %s145, %s146
      %p155 = scmp.eq.s32.totalorder %s24, 0
      %p156 = por %p154, %p155
      %p157 = scmp.ne.s32.totalorder %s145, %s146
      %p158 = scmp.eq.s32.totalorder %s25, 1
      %p159 = por %p157, %p158
      %p161 = scmp.ne.s32.totalorder %s146, %s160
      %p162 = scmp.eq.s32.totalorder %s25, 0
      %p163 = por %p161, %p162
      %s164 = ssub.s32 %s26, %s38
      %p165 = scmp.eq.s32.totalorder %s164, 0
      %s167 = sadd.s32 %s166, 1
      %s168 = scalar_select %p165, %s166, %s167
      %p171 = pneg %p165
      %p172 = scmp.eq.s32.totalorder %s19, 1
      %p173 = por %p171, %p172
      %p174 = scmp.ne.s32.totalorder %s166, %s169
      %p175 = scmp.eq.s32.totalorder %s19, 0
      %p176 = por %p174, %p175
      %p177 = scmp.ne.s32.totalorder %s166, %s169
      %p178 = scmp.eq.s32.totalorder %s24, 1
      %p179 = por %p177, %p178
      %p180 = scmp.ne.s32.totalorder %s169, %s170
      %p181 = scmp.eq.s32.totalorder %s24, 0
      %p182 = por %p180, %p181
      %p183 = scmp.ne.s32.totalorder %s169, %s170
      %p184 = scmp.eq.s32.totalorder %s25, 1
      %p185 = por %p183, %p184
      %p187 = scmp.ne.s32.totalorder %s170, %s186
      %p188 = scmp.eq.s32.totalorder %s25, 0
      %p189 = por %p187, %p188
      %p190 = scmp.le.s32.totalorder 1, %s19
      %p191 = scmp.lt.s32.totalorder %s19, 3
      %p192 = pnand %p190, %p191
      %p193 = pneg %p192
      // Predicated region
      $region9: #{tpu_custom_call.1} parent=5 // pred_check
        _
      $region10: #{tpu_custom_call.1} parent=5 // pred_check_branch
        %195 = sbr.rel (%p192) target = $region12
      $region11: #{tpu_custom_call.1} parent=5 // pred_region
        %s196 = ssub.s32 %s19, 1
        // Predicated region
        $region13: #{tpu_custom_call.1} parent=11 // pred_check
          %p197 = pneg %p83
        $region14: #{tpu_custom_call.1} parent=11 // pred_check_branch
          %199 = sbr.rel (%p197) target = $region16
        $region15: #{tpu_custom_call.1} parent=11 // pred_region
          %s200 = smul.u32 2, %s29
          %202 = vsyncadd [#allocation7], 0
          %s203 = smul.addr %s200, 4
          %s204 = scalar_lea.hbm %s1, %s203
          %s205 = sshll.u32 %s204, 4
          %s206 = int_to_ptr.hbm [resolvable:$true] %s205
          %s207 = sshll.u32 [#allocation6], 4
          %s208 = int_to_ptr.vmem [resolvable:$true] %s207
          %213 = dma.hbm_to_vmem [thread:$0]  %s206, 2048, %s208, [#allocation7], 128, 128, 8
        $region16: #{tpu_custom_call.1} parent=11 // pred_fallthru
          _
        // Predicated region
        $region17: #{tpu_custom_call.1} parent=11 // pred_check
          %p214 = pneg %p109
        $region18: #{tpu_custom_call.1} parent=11 // pred_check_branch
          %216 = sbr.rel (%p214) target = $region20
        $region19: #{tpu_custom_call.1} parent=11 // pred_region
          %s217 = smul.u32 2, %s29
          %219 = vsyncadd [#allocation7], 0
          %s220 = scalar_lea.hbm %s2, %s217
          %s222 = sshll.u32 %s220, 4
          %s223 = int_to_ptr.hbm [resolvable:$true] %s222
          %s224 = sshll.u32 [#allocation8], 4
          %s225 = int_to_ptr.vmem [resolvable:$true] %s224
          %227 = dma.hbm_to_vmem [thread:$0]  %s223, 32, %s225, [#allocation7]
        $region20: #{tpu_custom_call.1} parent=11 // pred_fallthru
          _
        // Predicated region
        $region21: #{tpu_custom_call.1} parent=11 // pred_check
          %p228 = pneg %p135
        $region22: #{tpu_custom_call.1} parent=11 // pred_check_branch
          %230 = sbr.rel (%p228) target = $region24
        $region23: #{tpu_custom_call.1} parent=11 // pred_region
          %s231 = smul.u32 32, %s29
          %233 = vsyncadd [#allocation10], 0
          %s234 = smul.addr %s231, 4
          %s235 = scalar_lea.hbm %s3, %s234
          %s236 = sshll.u32 %s235, 4
          %s237 = int_to_ptr.hbm [resolvable:$true] %s236
          %s238 = sshll.u32 [#allocation9], 4
          %s239 = int_to_ptr.vmem [resolvable:$true] %s238
          %244 = dma.hbm_to_vmem [thread:$0]  %s237, 2048, %s239, [#allocation10], 64, 64, 4
        $region24: #{tpu_custom_call.1} parent=11 // pred_fallthru
          _
        // Predicated region
        $region25: #{tpu_custom_call.1} parent=11 // pred_check
          %p245 = pneg %p156
        $region26: #{tpu_custom_call.1} parent=11 // pred_check_branch
          %247 = sbr.rel (%p245) target = $region28
        $region27: #{tpu_custom_call.1} parent=11 // pred_region
          _
        $region28: #{tpu_custom_call.1} parent=11 // pred_fallthru
          _
      $region12: #{tpu_custom_call.1} parent=5 // pred_fallthru
        _
      %p248 = scmp.lt.s32.totalorder %s19, 2
      // Predicated region
      $region29: #{tpu_custom_call.1} parent=5 // pred_check
        %p249 = pneg %p248
      $region30: #{tpu_custom_call.1} parent=5 // pred_check_branch
        %251 = sbr.rel (%p249) target = $region32
      $region31: #{tpu_custom_call.1} parent=5 // pred_region
        // Predicated region
        $region33: #{tpu_custom_call.1} parent=31 // pred_check
          %p252 = pneg %p51
        $region34: #{tpu_custom_call.1} parent=31 // pred_check_branch
          %254 = sbr.rel (%p252) target = $region36
        $region35: #{tpu_custom_call.1} parent=31 // pred_region
          %s255 = sand.u32 %s41, 1
          %s256 = scalar_lea.sflag [#allocation4], %s255
          %s257 = sand.u32 %s41, 1
          %s258 = smul.addr %s257, 4
          %s259 = scalar_lea.vmem [#allocation3], %s258
          %261 = vsyncadd %s256, 0
          %s262 = smul.addr %s26, 4
          %s263 = scalar_lea.hbm %s0, %s262
          %s265 = sshll.u32 %s263, 4
          %s266 = int_to_ptr.hbm [resolvable:$true] %s265
          %s267 = sshll.u32 %s259, 4
          %s268 = int_to_ptr.vmem [resolvable:$true] %s267
          %270 = dma.hbm_to_vmem [thread:$0]  %s266, 64, %s268, %s256
        $region36: #{tpu_custom_call.1} parent=31 // pred_fallthru
          _
      $region32: #{tpu_custom_call.1} parent=5 // pred_fallthru
        _
      %p271 = scmp.le.s32.totalorder 1, %s19
      %p272 = scmp.lt.s32.totalorder %s19, 3
      %p273 = pnand %p271, %p272
      %p274 = pneg %p273
      // Predicated region
      $region37: #{tpu_custom_call.1} parent=5 // pred_check
        _
      $region38: #{tpu_custom_call.1} parent=5 // pred_check_branch
        %276 = sbr.rel (%p273) target = $region40
      $region39: #{tpu_custom_call.1} parent=5 // pred_region
        %s277 = ssub.s32 %s19, 1
        %s278 = sand.u32 %s44, 1
        %s279 = scalar_lea.sflag [#allocation4], %s278
        %s280 = sand.u32 %s44, 1
        %s281 = smul.addr %s280, 4
        %s282 = scalar_lea.vmem [#allocation3], %s281
        // Predicated region
        $region41: #{tpu_custom_call.1} parent=39 // pred_check
          %p283 = pneg %p57
        $region42: #{tpu_custom_call.1} parent=39 // pred_check_branch
          %285 = sbr.rel (%p283) target = $region44
        $region43: #{tpu_custom_call.1} parent=39 // pred_region
          %287 = dma.done %s279, 64
        $region44: #{tpu_custom_call.1} parent=39 // pred_fallthru
          _
        // Predicated region
        $region45: #{tpu_custom_call.1} parent=39 // pred_check
          %p288 = pneg %p83
        $region46: #{tpu_custom_call.1} parent=39 // pred_check_branch
          %290 = sbr.rel (%p288) target = $region48
        $region47: #{tpu_custom_call.1} parent=39 // pred_region
          %292 = dma.done [#allocation7], 2048
        $region48: #{tpu_custom_call.1} parent=39 // pred_fallthru
          _
        // Predicated region
        $region49: #{tpu_custom_call.1} parent=39 // pred_check
          %p293 = pneg %p109
        $region50: #{tpu_custom_call.1} parent=39 // pred_check_branch
          %295 = sbr.rel (%p293) target = $region52
        $region51: #{tpu_custom_call.1} parent=39 // pred_region
          %297 = dma.done [#allocation7], 32
        $region52: #{tpu_custom_call.1} parent=39 // pred_fallthru
          _
        // Predicated region
        $region53: #{tpu_custom_call.1} parent=39 // pred_check
          %p298 = pneg %p135
        $region54: #{tpu_custom_call.1} parent=39 // pred_check_branch
          %300 = sbr.rel (%p298) target = $region56
        $region55: #{tpu_custom_call.1} parent=39 // pred_region
          %302 = dma.done [#allocation10], 2048
        $region56: #{tpu_custom_call.1} parent=39 // pred_fallthru
          _
        %s303 = sand.u32 %s44, 1
        %s304 = scalar_lea.sflag [#allocation4], %s303
        %s305 = sand.u32 %s44, 1
        %s306 = smul.addr %s305, 4
        %s307 = scalar_lea.vmem [#allocation3], %s306
        %p308 = pneg %p57
        %p309 = pneg %p54
        %p310 = pneg %p83
        %p311 = pneg %p80
        %p312 = pneg %p109
        %p313 = pneg %p106
        %p314 = pneg %p135
        %p315 = pneg %p132
        %p316 = pneg %p156
        %p317 = pneg %p153
        %p318 = pneg %p182
        %p319 = pneg %p179
        %s320 = sand.u32 %s169, 1
        %s321 = scalar_lea.sflag [#allocation5], %s320
        %s322 = sand.u32 %s169, 1
        %s323 = smul.addr %s322, 8
        %s324 = scalar_lea.vmem [#allocation11], %s323
        %s325 = smul.u32 2, %s29
        %s326 = smul.u32 2, %s29
        %s327 = smul.u32 32, %s29
        %p328 = scmp.eq.s32.totalorder %s29, 0
        // Predicated region
        $region57: #{tpu_custom_call.1} parent=39 // pred_check
          %p329 = pneg %p328
        $region58: #{tpu_custom_call.1} parent=39 // pred_check_branch
          %331 = sbr.rel (%p329) target = $region60
        $region59: #{tpu_custom_call.1} parent=39 // pred_region
          %332 = vst [vmem:[#allocation2] sm:$0xff] 0.0
        $region60: #{tpu_custom_call.1} parent=39 // pred_fallthru
          _
        %v333 = vld [vmem:[%s282] sm:$0xf]
        %v334 = vld [vmem:[#allocation6] sm:$0xff]
        %v335 = vld [vmem:[#allocation6 + $0x8] sm:$0xff]
        %v336 = vld [vmem:[#allocation6 + $0x10] sm:$0xff]
        %v337 = vld [vmem:[#allocation6 + $0x18] sm:$0xff]
        %v338 = vld [vmem:[#allocation6 + $0x20] sm:$0xff]
        %v339 = vld [vmem:[#allocation6 + $0x28] sm:$0xff]
        %v340 = vld [vmem:[#allocation6 + $0x30] sm:$0xff]
        %v341 = vld [vmem:[#allocation6 + $0x38] sm:$0xff]
        %v342 = vld [vmem:[#allocation6 + $0x40] sm:$0xff]
        %v343 = vld [vmem:[#allocation6 + $0x48] sm:$0xff]
        %v344 = vld [vmem:[#allocation6 + $0x50] sm:$0xff]
        %v345 = vld [vmem:[#allocation6 + $0x58] sm:$0xff]
        %v346 = vld [vmem:[#allocation6 + $0x60] sm:$0xff]
        %v347 = vld [vmem:[#allocation6 + $0x68] sm:$0xff]
        %v348 = vld [vmem:[#allocation6 + $0x70] sm:$0xff]
        %v349 = vld [vmem:[#allocation6 + $0x78] sm:$0xff]
        %v350 = vld [vmem:[#allocation8] sm:$0x3]
        %v352 = vperm.slane %v350, 0
        %v353 = vperm.slane %v350, 1
        %v372 = vunpack.c.l.b16 %v334
        %v373 = vunpack.c.h.b16 %v334
        %v374 = vunpack.c.l.b16 %v335
        %v375 = vunpack.c.h.b16 %v335
        %v376 = vunpack.c.l.b16 %v336
        %v377 = vunpack.c.h.b16 %v336
        %v378 = vunpack.c.l.b16 %v337
        %v379 = vunpack.c.h.b16 %v337
        %v380 = vunpack.c.l.b16 %v338
        %v381 = vunpack.c.h.b16 %v338
        %v382 = vunpack.c.l.b16 %v339
        %v383 = vunpack.c.h.b16 %v339
        %v384 = vunpack.c.l.b16 %v340
        %v385 = vunpack.c.h.b16 %v340
        %v386 = vunpack.c.l.b16 %v341
        %v387 = vunpack.c.h.b16 %v341
        %v388 = vunpack.c.l.b16 %v342
        %v389 = vunpack.c.h.b16 %v342
        %v390 = vunpack.c.l.b16 %v343
        %v391 = vunpack.c.h.b16 %v343
        %v392 = vunpack.c.l.b16 %v344
        %v393 = vunpack.c.h.b16 %v344
        %v394 = vunpack.c.l.b16 %v345
        %v395 = vunpack.c.h.b16 %v345
        %v396 = vunpack.c.l.b16 %v346
        %v397 = vunpack.c.h.b16 %v346
        %v398 = vunpack.c.l.b16 %v347
        %v399 = vunpack.c.h.b16 %v347
        %v400 = vunpack.c.l.b16 %v348
        %v401 = vunpack.c.h.b16 %v348
        %v402 = vunpack.c.l.b16 %v349
        %v403 = vunpack.c.h.b16 %v349
        %v404 = vpack.c.b16 %v374, %v372
        %v405 = vpack.c.b16 %v375, %v373
        %v406 = vpack.c.b16 %v378, %v376
        %v407 = vpack.c.b16 %v379, %v377
        %v408 = vpack.c.b16 %v382, %v380
        %v409 = vpack.c.b16 %v383, %v381
        %v410 = vpack.c.b16 %v386, %v384
        %v411 = vpack.c.b16 %v387, %v385
        %v412 = vpack.c.b16 %v390, %v388
        %v413 = vpack.c.b16 %v391, %v389
        %v414 = vpack.c.b16 %v394, %v392
        %v415 = vpack.c.b16 %v395, %v393
        %v416 = vpack.c.b16 %v398, %v396
        %v417 = vpack.c.b16 %v399, %v397
        %v418 = vpack.c.b16 %v402, %v400
        %v419 = vpack.c.b16 %v403, %v401
        %436 = vmatpush.bf16.msra.mxu0 %v418
        %437 = vmatpush.bf16.msra.mxu0 %v416
        %438 = vmatpush.bf16.msra.mxu0 %v414
        %439 = vmatpush.bf16.msra.mxu0 %v412
        %440 = vmatpush.bf16.msra.mxu0 %v410
        %441 = vmatpush.bf16.msra.mxu0 %v408
        %442 = vmatpush.bf16.msra.mxu0 %v406
        %443 = vmatpush.bf16.msra.mxu0 %v404
        %444 = vmatmul.bf16.gmra.mxu0 %v333
        %v445 = vpop.f32.mrf.mxu0
        %v446 = vadd.f32 %v352, %v445
        %v447 = vpop.f32.mrf.mxu0
        %448 = vdwg.mxu0
        %449 = vmatpush.bf16.msra.mxu0 %v419
        %450 = vmatpush.bf16.msra.mxu0 %v417
        %451 = vmatpush.bf16.msra.mxu0 %v415
        %452 = vmatpush.bf16.msra.mxu0 %v413
        %453 = vmatpush.bf16.msra.mxu0 %v411
        %454 = vmatpush.bf16.msra.mxu0 %v409
        %455 = vmatpush.bf16.msra.mxu0 %v407
        %456 = vmatpush.bf16.msra.mxu0 %v405
        %457 = vmatmul.bf16.gmra.mxu0 %v333
        %v458 = vpop.f32.mrf.mxu0
        %v459 = vadd.f32 %v353, %v458
        %v460 = vpop.f32.mrf.mxu0
        %461 = vdwg.mxu0
        %v462 = vmul.f32 %v446, 0.5
        %v463 = vmul.f32 %v459, 0.5
        %v464 = vmul.f32 %v446, 0.70710677
        %v465 = vmul.f32 %v459, 0.70710677
        %v466 = vand.u32 2147483647, %v464
        %v467 = vand.u32 2147483647, %v465
        %v468 = vmul.f32 %v466, 0.3275911
        %v469 = vmul.f32 %v467, 0.3275911
        %v470 = vadd.f32 %v468, 1.0
        %v471 = vadd.f32 %v469, 1.0
        %v472 = vrcp.pop %v470
        %v473 = vrcp.pop %v471
        %v474 = vmul.f32 %v472, 1.0614054
        %v475 = vmul.f32 %v473, 1.0614054
        %v476 = vsub.f32 %v474, 1.4531521
        %v477 = vsub.f32 %v475, 1.4531521
        %v478 = vmul.f32 %v476, %v472
        %v479 = vmul.f32 %v477, %v473
        %v480 = vadd.f32 %v478, 1.4214138
        %v481 = vadd.f32 %v479, 1.4214138
        %v482 = vmul.f32 %v480, %v472
        %v483 = vmul.f32 %v481, %v473
        %v484 = vsub.f32 %v482, 0.28449672
        %v485 = vsub.f32 %v483, 0.28449672
        %v486 = vmul.f32 %v484, %v472
        %v487 = vmul.f32 %v485, %v473
        %v488 = vadd.f32 %v486, 0.2548296
        %v489 = vadd.f32 %v487, 0.2548296
        %v490 = vmul.f32 %v488, %v472
        %v491 = vmul.f32 %v489, %v473
        %v492 = vsub.f32 0.0, %v466
        %v493 = vsub.f32 0.0, %v467
        %v494 = vmul.f32 %v492, %v466
        %v495 = vmul.f32 %v493, %v467
        %v496 = vmul.f32 %v494, 1.442695
        %v497 = vpow.pop %v496
        %v498 = vmul.f32 %v495, 1.442695
        %v499 = vpow.pop %v498
        %v500 = vmul.f32 %v490, %v497
        %v501 = vmul.f32 %v491, %v499
        %v502 = vsub.f32 1.0, %v500
        %v503 = vsub.f32 1.0, %v501
        %vm504 = vcmp.ge.f32.partialorder %v464, 0.0
        %vm505 = vcmp.ge.f32.partialorder %v465, 0.0
        %v506 = vsub.f32 0.0, %v502
        %v507 = vsub.f32 0.0, %v503
        %v508 = vsel %vm504, %v502, %v506
        %v509 = vsel %vm505, %v503, %v507
        %v510 = vadd.f32 %v508, 1.0
        %v511 = vadd.f32 %v509, 1.0
        %v512 = vmul.f32 %v462, %v510
        %v513 = vmul.f32 %v463, %v511
        %v514 = vld [vmem:[#allocation2] sm:$0xff]
        %v515 = vpack.c.bf16 %v512, %v512
        %v516 = vpack.c.bf16 %v513, %v513
        %v517 = vld [vmem:[#allocation9] sm:$0xf]
        %v518 = vld [vmem:[#allocation9 + $0x4] sm:$0xf]
        %v519 = vld [vmem:[#allocation9 + $0x8] sm:$0xf]
        %v520 = vld [vmem:[#allocation9 + $0xc] sm:$0xf]
        %v521 = vld [vmem:[#allocation9 + $0x10] sm:$0xf]
        %v522 = vld [vmem:[#allocation9 + $0x14] sm:$0xf]
        %v523 = vld [vmem:[#allocation9 + $0x18] sm:$0xf]
        %v524 = vld [vmem:[#allocation9 + $0x1c] sm:$0xf]
        %v525 = vld [vmem:[#allocation9 + $0x20] sm:$0xf]
        %v526 = vld [vmem:[#allocation9 + $0x24] sm:$0xf]
        %v527 = vld [vmem:[#allocation9 + $0x28] sm:$0xf]
        %v528 = vld [vmem:[#allocation9 + $0x2c] sm:$0xf]
        %v529 = vld [vmem:[#allocation9 + $0x30] sm:$0xf]
        %v530 = vld [vmem:[#allocation9 + $0x34] sm:$0xf]
        %v531 = vld [vmem:[#allocation9 + $0x38] sm:$0xf]
        %v532 = vld [vmem:[#allocation9 + $0x3c] sm:$0xf]
        %v533 = vld [vmem:[#allocation9 + $0x40] sm:$0xf]
        %v534 = vld [vmem:[#allocation9 + $0x44] sm:$0xf]
        %v535 = vld [vmem:[#allocation9 + $0x48] sm:$0xf]
        %v536 = vld [vmem:[#allocation9 + $0x4c] sm:$0xf]
        %v537 = vld [vmem:[#allocation9 + $0x50] sm:$0xf]
        %v538 = vld [vmem:[#allocation9 + $0x54] sm:$0xf]
        %v539 = vld [vmem:[#allocation9 + $0x58] sm:$0xf]
        %v540 = vld [vmem:[#allocation9 + $0x5c] sm:$0xf]
        %v541 = vld [vmem:[#allocation9 + $0x60] sm:$0xf]
        %v542 = vld [vmem:[#allocation9 + $0x64] sm:$0xf]
        %v543 = vld [vmem:[#allocation9 + $0x68] sm:$0xf]
        %v544 = vld [vmem:[#allocation9 + $0x6c] sm:$0xf]
        %v545 = vld [vmem:[#allocation9 + $0x70] sm:$0xf]
        %v546 = vld [vmem:[#allocation9 + $0x74] sm:$0xf]
        %v547 = vld [vmem:[#allocation9 + $0x78] sm:$0xf]
        %v548 = vld [vmem:[#allocation9 + $0x7c] sm:$0xf]
        %v581 = vunpack.c.l.b16 %v517
        %v582 = vunpack.c.l.b16 %v518
        %v583 = vunpack.c.l.b16 %v519
        %v584 = vunpack.c.l.b16 %v520
        %v585 = vunpack.c.l.b16 %v521
        %v586 = vunpack.c.l.b16 %v522
        %v587 = vunpack.c.l.b16 %v523
        %v588 = vunpack.c.l.b16 %v524
        %v589 = vunpack.c.l.b16 %v525
        %v590 = vunpack.c.l.b16 %v526
        %v591 = vunpack.c.l.b16 %v527
        %v592 = vunpack.c.l.b16 %v528
        %v593 = vunpack.c.l.b16 %v529
        %v594 = vunpack.c.l.b16 %v530
        %v595 = vunpack.c.l.b16 %v531
        %v596 = vunpack.c.l.b16 %v532
        %v597 = vunpack.c.l.b16 %v533
        %v598 = vunpack.c.l.b16 %v534
        %v599 = vunpack.c.l.b16 %v535
        %v600 = vunpack.c.l.b16 %v536
        %v601 = vunpack.c.l.b16 %v537
        %v602 = vunpack.c.l.b16 %v538
        %v603 = vunpack.c.l.b16 %v539
        %v604 = vunpack.c.l.b16 %v540
        %v605 = vunpack.c.l.b16 %v541
        %v606 = vunpack.c.l.b16 %v542
        %v607 = vunpack.c.l.b16 %v543
        %v608 = vunpack.c.l.b16 %v544
        %v609 = vunpack.c.l.b16 %v545
        %v610 = vunpack.c.l.b16 %v546
        %v611 = vunpack.c.l.b16 %v547
        %v612 = vunpack.c.l.b16 %v548
        %v613 = vpack.c.b16 %v582, %v581
        %v614 = vpack.c.b16 %v584, %v583
        %v615 = vpack.c.b16 %v586, %v585
        %v616 = vpack.c.b16 %v588, %v587
        %v617 = vpack.c.b16 %v590, %v589
        %v618 = vpack.c.b16 %v592, %v591
        %v619 = vpack.c.b16 %v594, %v593
        %v620 = vpack.c.b16 %v596, %v595
        %v621 = vpack.c.b16 %v598, %v597
        %v622 = vpack.c.b16 %v600, %v599
        %v623 = vpack.c.b16 %v602, %v601
        %v624 = vpack.c.b16 %v604, %v603
        %v625 = vpack.c.b16 %v606, %v605
        %v626 = vpack.c.b16 %v608, %v607
        %v627 = vpack.c.b16 %v610, %v609
        %v628 = vpack.c.b16 %v612, %v611
        %645 = vmatpush.bf16.msra.mxu0 %v620
        %646 = vmatpush.bf16.msra.mxu0 %v619
        %647 = vmatpush.bf16.msra.mxu0 %v618
        %648 = vmatpush.bf16.msra.mxu0 %v617
        %649 = vmatpush.bf16.msra.mxu0 %v616
        %650 = vmatpush.bf16.msra.mxu0 %v615
        %651 = vmatpush.bf16.msra.mxu0 %v614
        %652 = vmatpush.bf16.msra.mxu0 %v613
        %653 = vmatmul.bf16.gmra.mxu0 %v515
        %v654 = vpop.f32.mrf.mxu0
        %v655 = vadd.f32 0.0, %v654
        %v656 = vpop.f32.mrf.mxu0
        %657 = vdwg.mxu0
        %658 = vmatpush.bf16.msra.mxu0 %v628
        %659 = vmatpush.bf16.msra.mxu0 %v627
        %660 = vmatpush.bf16.msra.mxu0 %v626
        %661 = vmatpush.bf16.msra.mxu0 %v625
        %662 = vmatpush.bf16.msra.mxu0 %v624
        %663 = vmatpush.bf16.msra.mxu0 %v623
        %664 = vmatpush.bf16.msra.mxu0 %v622
        %665 = vmatpush.bf16.msra.mxu0 %v621
        %666 = vmatmul.bf16.gmra.mxu0 %v516
        %v667 = vpop.f32.mrf.mxu0
        %v668 = vadd.f32 %v655, %v667
        %v669 = vpop.f32.mrf.mxu0
        %670 = vdwg.mxu0
        %v671 = vadd.f32 %v514, %v668
        %672 = vst [vmem:[#allocation2] sm:$0xff] %v671
        // Predicated region
        $region61: #{tpu_custom_call.1} parent=39 // pred_check
          %p673 = pneg %p328
        $region62: #{tpu_custom_call.1} parent=39 // pred_check_branch
          %675 = sbr.rel (%p673) target = $region64
        $region63: #{tpu_custom_call.1} parent=39 // pred_region
          %v676 = vld [vmem:[#allocation2] sm:$0xff]
          %v677 = vld [vmem:[%s4] sm:$0x1]
          %v679 = vperm.slane %v677, 0
          %v681 = vadd.f32 %v676, %v679
          %682 = vst [vmem:[%s324] sm:$0xff] %v681
        $region64: #{tpu_custom_call.1} parent=39 // pred_fallthru
          _
        %s683 = sand.u32 %s169, 1
        %s684 = scalar_lea.sflag [#allocation5], %s683
        %s685 = sand.u32 %s169, 1
        %s686 = smul.addr %s685, 8
        %s687 = scalar_lea.vmem [#allocation11], %s686
        // Predicated region
        $region65: #{tpu_custom_call.1} parent=39 // pred_check
          %p688 = pneg %p179
        $region66: #{tpu_custom_call.1} parent=39 // pred_check_branch
          %690 = sbr.rel (%p688) target = $region68
        $region67: #{tpu_custom_call.1} parent=39 // pred_region
          %692 = vsyncadd %s684, 0
          %s693 = smul.addr %s28, 8
          %s694 = scalar_lea.hbm %s5, %s693
          %s696 = sshll.u32 %s687, 4
          %s697 = int_to_ptr.vmem [resolvable:$true] %s696
          %s698 = sshll.u32 %s694, 4
          %s699 = int_to_ptr.hbm [resolvable:$true] %s698
          %701 = dma.vmem_to_hbm [thread:$0]  %s697, 128, %s699, %s684
        $region68: #{tpu_custom_call.1} parent=39 // pred_fallthru
          _
      $region40: #{tpu_custom_call.1} parent=5 // pred_fallthru
        _
      %p702 = scmp.le.s32.totalorder 2, %s19
      // Predicated region
      $region69: #{tpu_custom_call.1} parent=5 // pred_check
        %p703 = pneg %p702
      $region70: #{tpu_custom_call.1} parent=5 // pred_check_branch
        %705 = sbr.rel (%p703) target = $region72
      $region71: #{tpu_custom_call.1} parent=5 // pred_region
        %s706 = ssub.s32 %s19, 2
        // Predicated region
        $region73: #{tpu_custom_call.1} parent=71 // pred_check
          %p707 = pneg %p185
        $region74: #{tpu_custom_call.1} parent=71 // pred_check_branch
          %709 = sbr.rel (%p707) target = $region76
        $region75: #{tpu_custom_call.1} parent=71 // pred_region
          %s710 = sand.u32 %s170, 1
          %s711 = scalar_lea.sflag [#allocation5], %s710
          %s712 = sand.u32 %s170, 1
          %s713 = smul.addr %s712, 8
          %s714 = scalar_lea.vmem [#allocation11], %s713
          %716 = dma.done %s711, 128
        $region76: #{tpu_custom_call.1} parent=71 // pred_fallthru
          _
      $region72: #{tpu_custom_call.1} parent=5 // pred_fallthru
        _
    $region6: #{tpu_custom_call.1} parent=1 // loop_footer
      %s23 = sadd.s32 1, %s19
    $region7: #{tpu_custom_call.1} parent=1 // loop_footer_branch
      %18 = sbr.rel target = $region3
    $region8: #{tpu_custom_call.1} parent=1 // loop_exit
      _
    %717 = vsyncpa [#allocation4], 1
    %s718 = scalar_lea.sflag [#allocation4], 1
    %719 = vsyncpa %s718, 1
    %720 = vsyncpa [#allocation7], 1
    %721 = vsyncpa [#allocation10], 1
    %722 = vsyncpa [#allocation5], 1
    %s723 = scalar_lea.sflag [#allocation5], 1
    %724 = vsyncpa %s723, 1

// kernel: tpu_custom_call.1
$region0: #{tpu_custom_call.1}
  #allocation0 [shape = 'u32[]', space=smem, size = 0x4, offset = 0x4, fixed_abs, tag = 'smem constant byte address 0x4 - core index']
  #allocation1 [shape = 'u32[72,128]{1,0:T(1,128)}', space=vmem, size = 0x9000, scoped, tag = 'internal scratch']
  #allocation2 [shape = 'f32[8,128]{1,0:T(8,128)}', space=vmem, size = 0x1000, scoped, tag = 'scratch operand']
  %s0 = inlined_call_operand.hbm [shape: bf16[16,128], index: 0, kind: input, shape index: {}]
  %s1 = inlined_call_operand.hbm [shape: bf16[128,256], index: 1, kind: input, shape index: {}]
  %s2 = inlined_call_operand.hbm [shape: f32[1,256], index: 2, kind: input, shape index: {}]
  %s3 = inlined_call_operand.hbm [shape: bf16[256,128], index: 3, kind: input, shape index: {}]
  %s4 = inlined_call_operand.vmem [shape: f32[1,128], index: 4, kind: input, shape index: {}]
  %s5 = inlined_call_operand.hbm [shape: f32[16,128], index: 5, kind: output, shape index: {}]
  %s6 = sld [smem:[#allocation0]]
  $region77: #{tpu_custom_call.1} parent=0
    _
  %s8 = ssub.s32 1, %s6
  %s9 = scalar_select 0, %s8, %s6
  $region1: #{tpu_custom_call.1} parent=0
    #allocation3 [shape = 'u8[4096]{0}', space=vmem, size = 0x1000, scoped, tag = 'input window, operand 0']
    #allocation4 [shape = 's32[2]{0}', space=sflag, size = 0x8, scoped, tag = 'scoped memory for tpu_custom_call.1']
    #allocation5 [shape = 's32[2]{0}', space=sflag, size = 0x8, scoped, tag = 'scoped memory for tpu_custom_call.1']
    #allocation6 [shape = 'u8[65536]{0}', space=vmem, size = 0x10000, scoped, tag = 'input window, operand 1, single buffered']
    #allocation7 [shape = 's32[1]{0}', space=sflag, size = 0x4, scoped, tag = 'scoped memory for tpu_custom_call.1']
    #allocation8 [shape = 'u8[1024]{0}', space=vmem, size = 0x400, scoped, tag = 'input window, operand 2, single buffered']
    #allocation9 [shape = 'u8[65536]{0}', space=vmem, size = 0x10000, scoped, tag = 'input window, operand 3, single buffered']
    #allocation10 [shape = 's32[1]{0}', space=sflag, size = 0x4, scoped, tag = 'scoped memory for tpu_custom_call.1']
    #allocation11 [shape = 'u8[8192]{0}', space=vmem, size = 0x2000, scoped, tag = 'output window, operand 0']
    %10 = vsyncpa [#allocation4], 0
    %s11 = scalar_lea.sflag [#allocation4], 1
    %12 = vsyncpa %s11, 0
    %13 = vsyncpa [#allocation7], 0
    %14 = vsyncpa [#allocation10], 0
    %15 = vsyncpa [#allocation5], 0
    %s16 = scalar_lea.sflag [#allocation5], 1
    %17 = vsyncpa %s16, 0
    loop: start=0, step=1, limit=4
    $region2: #{tpu_custom_call.1} parent=1 // loop_pre_header
      _
    $region3: #{tpu_custom_call.1} parent=1 // loop_header
      %s19 = sphi 0, %s23
      %p20 = scmp.ge.s32.totalorder %s19, 4
      %s26 = sphi 0, %s38
      %s27 = sphi 0, %s34
      %s28 = sphi 0, %s26
      %s29 = sphi 0, %s27
      %s30 = sphi 0, %s28
      %s31 = sphi 0, %s29
      %s41 = sphi 0, %s43
      %s44 = sphi 0, %s41
      %s45 = sphi 0, %s44
      %s61 = sphi 0, %s45
      %s67 = sphi 0, %s69
      %s70 = sphi 0, %s67
      %s71 = sphi 0, %s70
      %s87 = sphi 0, %s71
      %s93 = sphi 0, %s95
      %s96 = sphi 0, %s93
      %s97 = sphi 0, %s96
      %s113 = sphi 0, %s97
      %s119 = sphi 0, %s121
      %s122 = sphi 0, %s119
      %s123 = sphi 0, %s122
      %s139 = sphi 0, %s123
      %s143 = sphi 0, %s143
      %s145 = sphi 0, %s143
      %s146 = sphi 0, %s145
      %s160 = sphi 0, %s146
      %s166 = sphi 0, %s168
      %s169 = sphi 0, %s166
      %s170 = sphi 0, %s169
      %s186 = sphi 0, %s170
    $region4: #{tpu_custom_call.1} parent=1 // loop_header_branch
      %22 = sbr.rel (%p20) target = $region8
    $region5: #{tpu_custom_call.1} parent=1 // loop_body
      %s24 = ssub.s32 %s19, 1
      %s25 = ssub.s32 %s19, 2
      %s32 = sadd.s32 1, %s27
      %p33 = scmp.ge.s32.totalorder %s32, 1
      %s34 = scalar_select %p33, 0, %s32
      %s35 = sadd.s32 1, %s26
      %s36 = scalar_select %p33, %s35, %s26
      %p37 = scmp.ge.s32.totalorder %s36, 2
      %s38 = scalar_select %p37, 0, %s36
      %s39 = ssub.s32 %s26, %s38
      %p40 = scmp.eq.s32.totalorder %s39, 0
      %s42 = sadd.s32 %s41, 1
      %s43 = scalar_select %p40, %s41, %s42
      %p46 = pneg %p40
      %p47 = scmp.eq.s32.totalorder %s19, 1
      %p48 = por %p46, %p47
      %p49 = scmp.ne.s32.totalorder %s41, %s44
      %p50 = scmp.eq.s32.totalorder %s19, 0
      %p51 = por %p49, %p50
      %p52 = scmp.ne.s32.totalorder %s41, %s44
      %p53 = scmp.eq.s32.totalorder %s24, 1
      %p54 = por %p52, %p53
      %p55 = scmp.ne.s32.totalorder %s44, %s45
      %p56 = scmp.eq.s32.totalorder %s24, 0
      %p57 = por %p55, %p56
      %p58 = scmp.ne.s32.totalorder %s44, %s45
      %p59 = scmp.eq.s32.totalorder %s25, 1
      %p60 = por %p58, %p59
      %p62 = scmp.ne.s32.totalorder %s45, %s61
      %p63 = scmp.eq.s32.totalorder %s25, 0
      %p64 = por %p62, %p63
      %s65 = ssub.s32 %s27, %s34
      %p66 = scmp.eq.s32.totalorder %s65, 0
      %s68 = sadd.s32 %s67, 1
      %s69 = scalar_select %p66, %s67, %s68
      %p72 = pneg %p66
      %p73 = scmp.eq.s32.totalorder %s19, 1
      %p74 = por %p72, %p73
      %p75 = scmp.ne.s32.totalorder %s67, %s70
      %p76 = scmp.eq.s32.totalorder %s19, 0
      %p77 = por %p75, %p76
      %p78 = scmp.ne.s32.totalorder %s67, %s70
      %p79 = scmp.eq.s32.totalorder %s24, 1
      %p80 = por %p78, %p79
      %p81 = scmp.ne.s32.totalorder %s70, %s71
      %p82 = scmp.eq.s32.totalorder %s24, 0
      %p83 = por %p81, %p82
      %p84 = scmp.ne.s32.totalorder %s70, %s71
      %p85 = scmp.eq.s32.totalorder %s25, 1
      %p86 = por %p84, %p85
      %p88 = scmp.ne.s32.totalorder %s71, %s87
      %p89 = scmp.eq.s32.totalorder %s25, 0
      %p90 = por %p88, %p89
      %s91 = ssub.s32 %s27, %s34
      %p92 = scmp.eq.s32.totalorder %s91, 0
      %s94 = sadd.s32 %s93, 1
      %s95 = scalar_select %p92, %s93, %s94
      %p98 = pneg %p92
      %p99 = scmp.eq.s32.totalorder %s19, 1
      %p100 = por %p98, %p99
      %p101 = scmp.ne.s32.totalorder %s93, %s96
      %p102 = scmp.eq.s32.totalorder %s19, 0
      %p103 = por %p101, %p102
      %p104 = scmp.ne.s32.totalorder %s93, %s96
      %p105 = scmp.eq.s32.totalorder %s24, 1
      %p106 = por %p104, %p105
      %p107 = scmp.ne.s32.totalorder %s96, %s97
      %p108 = scmp.eq.s32.totalorder %s24, 0
      %p109 = por %p107, %p108
      %p110 = scmp.ne.s32.totalorder %s96, %s97
      %p111 = scmp.eq.s32.totalorder %s25, 1
      %p112 = por %p110, %p111
      %p114 = scmp.ne.s32.totalorder %s97, %s113
      %p115 = scmp.eq.s32.totalorder %s25, 0
      %p116 = por %p114, %p115
      %s117 = ssub.s32 %s27, %s34
      %p118 = scmp.eq.s32.totalorder %s117, 0
      %s120 = sadd.s32 %s119, 1
      %s121 = scalar_select %p118, %s119, %s120
      %p124 = pneg %p118
      %p125 = scmp.eq.s32.totalorder %s19, 1
      %p126 = por %p124, %p125
      %p127 = scmp.ne.s32.totalorder %s119, %s122
      %p128 = scmp.eq.s32.totalorder %s19, 0
      %p129 = por %p127, %p128
      %p130 = scmp.ne.s32.totalorder %s119, %s122
      %p131 = scmp.eq.s32.totalorder %s24, 1
      %p132 = por %p130, %p131
      %p133 = scmp.ne.s32.totalorder %s122, %s123
      %p134 = scmp.eq.s32.totalorder %s24, 0
      %p135 = por %p133, %p134
      %p136 = scmp.ne.s32.totalorder %s122, %s123
      %p137 = scmp.eq.s32.totalorder %s25, 1
      %p138 = por %p136, %p137
      %p140 = scmp.ne.s32.totalorder %s123, %s139
      %p141 = scmp.eq.s32.totalorder %s25, 0
      %p142 = por %p140, %p141
      %s144 = sadd.s32 %s143, 1
      %p147 = scmp.eq.s32.totalorder %s19, 1
      %p148 = scmp.ne.s32.totalorder %s143, %s145
      %p149 = scmp.eq.s32.totalorder %s19, 0
      %p150 = por %p148, %p149
      %p151 = scmp.ne.s32.totalorder %s143, %s145
      %p152 = scmp.eq.s32.totalorder %s24, 1
      %p153 = por %p151, %p152
      %p154 = scmp.ne.s32.totalorder %s145, %s146
      %p155 = scmp.eq.s32.totalorder %s24, 0
      %p156 = por %p154, %p155
      %p157 = scmp.ne.s32.totalorder %s145, %s146
      %p158 = scmp.eq.s32.totalorder %s25, 1
      %p159 = por %p157, %p158
      %p161 = scmp.ne.s32.totalorder %s146, %s160
      %p162 = scmp.eq.s32.totalorder %s25, 0
      %p163 = por %p161, %p162
      %s164 = ssub.s32 %s26, %s38
      %p165 = scmp.eq.s32.totalorder %s164, 0
      %s167 = sadd.s32 %s166, 1
      %s168 = scalar_select %p165, %s166, %s167
      %p171 = pneg %p165
      %p172 = scmp.eq.s32.totalorder %s19, 1
      %p173 = por %p171, %p172
      %p174 = scmp.ne.s32.totalorder %s166, %s169
      %p175 = scmp.eq.s32.totalorder %s19, 0
      %p176 = por %p174, %p175
      %p177 = scmp.ne.s32.totalorder %s166, %s169
      %p178 = scmp.eq.s32.totalorder %s24, 1
      %p179 = por %p177, %p178
      %p180 = scmp.ne.s32.totalorder %s169, %s170
      %p181 = scmp.eq.s32.totalorder %s24, 0
      %p182 = por %p180, %p181
      %p183 = scmp.ne.s32.totalorder %s169, %s170
      %p184 = scmp.eq.s32.totalorder %s25, 1
      %p185 = por %p183, %p184
      %p187 = scmp.ne.s32.totalorder %s170, %s186
      %p188 = scmp.eq.s32.totalorder %s25, 0
      %p189 = por %p187, %p188
      %p190 = scmp.le.s32.totalorder 1, %s19
      %p191 = scmp.lt.s32.totalorder %s19, 3
      %p192 = pnand %p190, %p191
      %p193 = pneg %p192
      // Predicated region
      $region9: #{tpu_custom_call.1} parent=5 // pred_check
        _
      $region10: #{tpu_custom_call.1} parent=5 // pred_check_branch
        %195 = sbr.rel (%p192) target = $region12
      $region11: #{tpu_custom_call.1} parent=5 // pred_region
        %s196 = ssub.s32 %s19, 1
        // Predicated region
        $region13: #{tpu_custom_call.1} parent=11 // pred_check
          %p197 = pneg %p83
        $region14: #{tpu_custom_call.1} parent=11 // pred_check_branch
          %199 = sbr.rel (%p197) target = $region16
        $region15: #{tpu_custom_call.1} parent=11 // pred_region
          %s200 = smul.u32 2, %s29
          %202 = vsyncadd [#allocation7], 0
          %s203 = smul.addr %s200, 4
          %s204 = scalar_lea.hbm %s1, %s203
          %s205 = sshll.u32 %s204, 4
          %s206 = int_to_ptr.hbm [resolvable:$true] %s205
          %s207 = sshll.u32 [#allocation6], 4
          %s208 = int_to_ptr.vmem [resolvable:$true] %s207
          %213 = dma.hbm_to_vmem [thread:$0]  %s206, 2048, %s208, [#allocation7], 128, 128, 8
        $region16: #{tpu_custom_call.1} parent=11 // pred_fallthru
          _
        // Predicated region
        $region17: #{tpu_custom_call.1} parent=11 // pred_check
          %p214 = pneg %p109
        $region18: #{tpu_custom_call.1} parent=11 // pred_check_branch
          %216 = sbr.rel (%p214) target = $region20
        $region19: #{tpu_custom_call.1} parent=11 // pred_region
          %s217 = smul.u32 2, %s29
          %219 = vsyncadd [#allocation7], 0
          %s220 = scalar_lea.hbm %s2, %s217
          %s222 = sshll.u32 %s220, 4
          %s223 = int_to_ptr.hbm [resolvable:$true] %s222
          %s224 = sshll.u32 [#allocation8], 4
          %s225 = int_to_ptr.vmem [resolvable:$true] %s224
          %227 = dma.hbm_to_vmem [thread:$0]  %s223, 32, %s225, [#allocation7]
        $region20: #{tpu_custom_call.1} parent=11 // pred_fallthru
          _
        // Predicated region
        $region21: #{tpu_custom_call.1} parent=11 // pred_check
          %p228 = pneg %p135
        $region22: #{tpu_custom_call.1} parent=11 // pred_check_branch
          %230 = sbr.rel (%p228) target = $region24
        $region23: #{tpu_custom_call.1} parent=11 // pred_region
          %s231 = smul.u32 32, %s29
          %233 = vsyncadd [#allocation10], 0
          %s234 = smul.addr %s231, 4
          %s235 = scalar_lea.hbm %s3, %s234
          %s236 = sshll.u32 %s235, 4
          %s237 = int_to_ptr.hbm [resolvable:$true] %s236
          %s238 = sshll.u32 [#allocation9], 4
          %s239 = int_to_ptr.vmem [resolvable:$true] %s238
          %244 = dma.hbm_to_vmem [thread:$0]  %s237, 2048, %s239, [#allocation10], 64, 64, 4
        $region24: #{tpu_custom_call.1} parent=11 // pred_fallthru
          _
        // Predicated region
        $region25: #{tpu_custom_call.1} parent=11 // pred_check
          %p245 = pneg %p156
        $region26: #{tpu_custom_call.1} parent=11 // pred_check_branch
          %247 = sbr.rel (%p245) target = $region28
        $region27: #{tpu_custom_call.1} parent=11 // pred_region
          _
        $region28: #{tpu_custom_call.1} parent=11 // pred_fallthru
          _
      $region12: #{tpu_custom_call.1} parent=5 // pred_fallthru
        _
      %p248 = scmp.lt.s32.totalorder %s19, 2
      // Predicated region
      $region29: #{tpu_custom_call.1} parent=5 // pred_check
        %p249 = pneg %p248
      $region30: #{tpu_custom_call.1} parent=5 // pred_check_branch
        %251 = sbr.rel (%p249) target = $region32
      $region31: #{tpu_custom_call.1} parent=5 // pred_region
        // Predicated region
        $region33: #{tpu_custom_call.1} parent=31 // pred_check
          %p252 = pneg %p51
        $region34: #{tpu_custom_call.1} parent=31 // pred_check_branch
          %254 = sbr.rel (%p252) target = $region36
        $region35: #{tpu_custom_call.1} parent=31 // pred_region
          %s255 = sand.u32 %s41, 1
          %s256 = scalar_lea.sflag [#allocation4], %s255
          %s257 = sand.u32 %s41, 1
          %s258 = smul.addr %s257, 4
          %s259 = scalar_lea.vmem [#allocation3], %s258
          %261 = vsyncadd %s256, 0
          %s262 = smul.addr %s26, 4
          %s263 = scalar_lea.hbm %s0, %s262
          %s265 = sshll.u32 %s263, 4
          %s266 = int_to_ptr.hbm [resolvable:$true] %s265
          %s267 = sshll.u32 %s259, 4
          %s268 = int_to_ptr.vmem [resolvable:$true] %s267
          %270 = dma.hbm_to_vmem [thread:$0]  %s266, 64, %s268, %s256
        $region36: #{tpu_custom_call.1} parent=31 // pred_fallthru
          _
      $region32: #{tpu_custom_call.1} parent=5 // pred_fallthru
        _
      %p271 = scmp.le.s32.totalorder 1, %s19
      %p272 = scmp.lt.s32.totalorder %s19, 3
      %p273 = pnand %p271, %p272
      %p274 = pneg %p273
      // Predicated region
      $region37: #{tpu_custom_call.1} parent=5 // pred_check
        _
      $region38: #{tpu_custom_call.1} parent=5 // pred_check_branch
        %276 = sbr.rel (%p273) target = $region40
      $region39: #{tpu_custom_call.1} parent=5 // pred_region
        %s277 = ssub.s32 %s19, 1
        %s278 = sand.u32 %s44, 1
        %s279 = scalar_lea.sflag [#allocation4], %s278
        %s280 = sand.u32 %s44, 1
        %s281 = smul.addr %s280, 4
        %s282 = scalar_lea.vmem [#allocation3], %s281
        // Predicated region
        $region41: #{tpu_custom_call.1} parent=39 // pred_check
          %p283 = pneg %p57
        $region42: #{tpu_custom_call.1} parent=39 // pred_check_branch
          %285 = sbr.rel (%p283) target = $region44
        $region43: #{tpu_custom_call.1} parent=39 // pred_region
          %287 = dma.done %s279, 64
        $region44: #{tpu_custom_call.1} parent=39 // pred_fallthru
          _
        // Predicated region
        $region45: #{tpu_custom_call.1} parent=39 // pred_check
          %p288 = pneg %p83
        $region46: #{tpu_custom_call.1} parent=39 // pred_check_branch
          %290 = sbr.rel (%p288) target = $region48
        $region47: #{tpu_custom_call.1} parent=39 // pred_region
          %292 = dma.done [#allocation7], 2048
        $region48: #{tpu_custom_call.1} parent=39 // pred_fallthru
          _
        // Predicated region
        $region49: #{tpu_custom_call.1} parent=39 // pred_check
          %p293 = pneg %p109
        $region50: #{tpu_custom_call.1} parent=39 // pred_check_branch
          %295 = sbr.rel (%p293) target = $region52
        $region51: #{tpu_custom_call.1} parent=39 // pred_region
          %297 = dma.done [#allocation7], 32
        $region52: #{tpu_custom_call.1} parent=39 // pred_fallthru
          _
        // Predicated region
        $region53: #{tpu_custom_call.1} parent=39 // pred_check
          %p298 = pneg %p135
        $region54: #{tpu_custom_call.1} parent=39 // pred_check_branch
          %300 = sbr.rel (%p298) target = $region56
        $region55: #{tpu_custom_call.1} parent=39 // pred_region
          %302 = dma.done [#allocation10], 2048
        $region56: #{tpu_custom_call.1} parent=39 // pred_fallthru
          _
        %s303 = sand.u32 %s44, 1
        %s304 = scalar_lea.sflag [#allocation4], %s303
        %s305 = sand.u32 %s44, 1
        %s306 = smul.addr %s305, 4
        %s307 = scalar_lea.vmem [#allocation3], %s306
        %p308 = pneg %p57
        %p309 = pneg %p54
        %p310 = pneg %p83
        %p311 = pneg %p80
        %p312 = pneg %p109
        %p313 = pneg %p106
        %p314 = pneg %p135
        %p315 = pneg %p132
        %p316 = pneg %p156
        %p317 = pneg %p153
        %p318 = pneg %p182
        %p319 = pneg %p179
        %s320 = sand.u32 %s169, 1
        %s321 = scalar_lea.sflag [#allocation5], %s320
        %s322 = sand.u32 %s169, 1
        %s323 = smul.addr %s322, 8
        %s324 = scalar_lea.vmem [#allocation11], %s323
        %s325 = smul.u32 2, %s29
        %s326 = smul.u32 2, %s29
        %s327 = smul.u32 32, %s29
        %p328 = scmp.eq.s32.totalorder %s29, 0
        // Predicated region
        $region57: #{tpu_custom_call.1} parent=39 // pred_check
          %p329 = pneg %p328
        $region58: #{tpu_custom_call.1} parent=39 // pred_check_branch
          %331 = sbr.rel (%p329) target = $region60
        $region59: #{tpu_custom_call.1} parent=39 // pred_region
          %332 = vst [vmem:[#allocation2] sm:$0xff] 0.0
        $region60: #{tpu_custom_call.1} parent=39 // pred_fallthru
          _
        %v333 = vld [vmem:[%s282] sm:$0xf]
        %v334 = vld [vmem:[#allocation6] sm:$0xff]
        %v335 = vld [vmem:[#allocation6 + $0x8] sm:$0xff]
        %v336 = vld [vmem:[#allocation6 + $0x10] sm:$0xff]
        %v337 = vld [vmem:[#allocation6 + $0x18] sm:$0xff]
        %v338 = vld [vmem:[#allocation6 + $0x20] sm:$0xff]
        %v339 = vld [vmem:[#allocation6 + $0x28] sm:$0xff]
        %v340 = vld [vmem:[#allocation6 + $0x30] sm:$0xff]
        %v341 = vld [vmem:[#allocation6 + $0x38] sm:$0xff]
        %v342 = vld [vmem:[#allocation6 + $0x40] sm:$0xff]
        %v343 = vld [vmem:[#allocation6 + $0x48] sm:$0xff]
        %v344 = vld [vmem:[#allocation6 + $0x50] sm:$0xff]
        %v345 = vld [vmem:[#allocation6 + $0x58] sm:$0xff]
        %v346 = vld [vmem:[#allocation6 + $0x60] sm:$0xff]
        %v347 = vld [vmem:[#allocation6 + $0x68] sm:$0xff]
        %v348 = vld [vmem:[#allocation6 + $0x70] sm:$0xff]
        %v349 = vld [vmem:[#allocation6 + $0x78] sm:$0xff]
        %v350 = vld [vmem:[#allocation8] sm:$0x3]
        %v352 = vperm.slane %v350, 0
        %v353 = vperm.slane %v350, 1
        %v372 = vunpack.c.l.b16 %v334
        %v373 = vunpack.c.h.b16 %v334
        %v374 = vunpack.c.l.b16 %v335
        %v375 = vunpack.c.h.b16 %v335
        %v376 = vunpack.c.l.b16 %v336
        %v377 = vunpack.c.h.b16 %v336
        %v378 = vunpack.c.l.b16 %v337
        %v379 = vunpack.c.h.b16 %v337
        %v380 = vunpack.c.l.b16 %v338
        %v381 = vunpack.c.h.b16 %v338
        %v382 = vunpack.c.l.b16 %v339
        %v383 = vunpack.c.h.b16 %v339
        %v384 = vunpack.c.l.b16 %v340
        %v385 = vunpack.c.h.b16 %v340
        %v386 = vunpack.c.l.b16 %v341
        %v387 = vunpack.c.h.b16 %v341
        %v388 = vunpack.c.l.b16 %v342
        %v389 = vunpack.c.h.b16 %v342
        %v390 = vunpack.c.l.b16 %v343
        %v391 = vunpack.c.h.b16 %v343
        %v392 = vunpack.c.l.b16 %v344
        %v393 = vunpack.c.h.b16 %v344
        %v394 = vunpack.c.l.b16 %v345
        %v395 = vunpack.c.h.b16 %v345
        %v396 = vunpack.c.l.b16 %v346
        %v397 = vunpack.c.h.b16 %v346
        %v398 = vunpack.c.l.b16 %v347
        %v399 = vunpack.c.h.b16 %v347
        %v400 = vunpack.c.l.b16 %v348
        %v401 = vunpack.c.h.b16 %v348
        %v402 = vunpack.c.l.b16 %v349
        %v403 = vunpack.c.h.b16 %v349
        %v404 = vpack.c.b16 %v374, %v372
        %v405 = vpack.c.b16 %v375, %v373
        %v406 = vpack.c.b16 %v378, %v376
        %v407 = vpack.c.b16 %v379, %v377
        %v408 = vpack.c.b16 %v382, %v380
        %v409 = vpack.c.b16 %v383, %v381
        %v410 = vpack.c.b16 %v386, %v384
        %v411 = vpack.c.b16 %v387, %v385
        %v412 = vpack.c.b16 %v390, %v388
        %v413 = vpack.c.b16 %v391, %v389
        %v414 = vpack.c.b16 %v394, %v392
        %v415 = vpack.c.b16 %v395, %v393
        %v416 = vpack.c.b16 %v398, %v396
        %v417 = vpack.c.b16 %v399, %v397
        %v418 = vpack.c.b16 %v402, %v400
        %v419 = vpack.c.b16 %v403, %v401
        %436 = vmatpush.bf16.msra.mxu0 %v418
        %437 = vmatpush.bf16.msra.mxu0 %v416
        %438 = vmatpush.bf16.msra.mxu0 %v414
        %439 = vmatpush.bf16.msra.mxu0 %v412
        %440 = vmatpush.bf16.msra.mxu0 %v410
        %441 = vmatpush.bf16.msra.mxu0 %v408
        %442 = vmatpush.bf16.msra.mxu0 %v406
        %443 = vmatpush.bf16.msra.mxu0 %v404
        %444 = vmatmul.bf16.gmra.mxu0 %v333
        %v445 = vpop.f32.mrf.mxu0
        %v446 = vadd.f32 %v352, %v445
        %v447 = vpop.f32.mrf.mxu0
        %448 = vdwg.mxu0
        %449 = vmatpush.bf16.msra.mxu0 %v419
        %450 = vmatpush.bf16.msra.mxu0 %v417
        %451 = vmatpush.bf16.msra.mxu0 %v415
        %452 = vmatpush.bf16.msra.mxu0 %v413
        %453 = vmatpush.bf16.msra.mxu0 %v411
        %454 = vmatpush.bf16.msra.mxu0 %v409
        %455 = vmatpush.bf16.msra.mxu0 %v407
        %456 = vmatpush.bf16.msra.mxu0 %v405
        %457 = vmatmul.bf16.gmra.mxu0 %v333
        %v458 = vpop.f32.mrf.mxu0
        %v459 = vadd.f32 %v353, %v458
        %v460 = vpop.f32.mrf.mxu0
        %461 = vdwg.mxu0
        %v462 = vmul.f32 %v446, 0.5
        %v463 = vmul.f32 %v459, 0.5
        %v464 = vmul.f32 %v446, 0.70710677
        %v465 = vmul.f32 %v459, 0.70710677
        %v466 = vand.u32 2147483647, %v464
        %v467 = vand.u32 2147483647, %v465
        %v468 = vmul.f32 %v466, 0.3275911
        %v469 = vmul.f32 %v467, 0.3275911
        %v470 = vadd.f32 %v468, 1.0
        %v471 = vadd.f32 %v469, 1.0
        %v472 = vrcp.pop %v470
        %v473 = vrcp.pop %v471
        %v474 = vmul.f32 %v472, 1.0614054
        %v475 = vmul.f32 %v473, 1.0614054
        %v476 = vsub.f32 %v474, 1.4531521
        %v477 = vsub.f32 %v475, 1.4531521
        %v478 = vmul.f32 %v476, %v472
        %v479 = vmul.f32 %v477, %v473
        %v480 = vadd.f32 %v478, 1.4214138
        %v481 = vadd.f32 %v479, 1.4214138
        %v482 = vmul.f32 %v480, %v472
        %v483 = vmul.f32 %v481, %v473
        %v484 = vsub.f32 %v482, 0.28449672
        %v485 = vsub.f32 %v483, 0.28449672
        %v486 = vmul.f32 %v484, %v472
        %v487 = vmul.f32 %v485, %v473
        %v488 = vadd.f32 %v486, 0.2548296
        %v489 = vadd.f32 %v487, 0.2548296
        %v490 = vmul.f32 %v488, %v472
        %v491 = vmul.f32 %v489, %v473
        %v492 = vsub.f32 0.0, %v466
        %v493 = vsub.f32 0.0, %v467
        %v494 = vmul.f32 %v492, %v466
        %v495 = vmul.f32 %v493, %v467
        %v496 = vmul.f32 %v494, 1.442695
        %v497 = vpow.pop %v496
        %v498 = vmul.f32 %v495, 1.442695
        %v499 = vpow.pop %v498
        %v500 = vmul.f32 %v490, %v497
        %v501 = vmul.f32 %v491, %v499
        %v502 = vsub.f32 1.0, %v500
        %v503 = vsub.f32 1.0, %v501
        %vm504 = vcmp.ge.f32.partialorder %v464, 0.0
        %vm505 = vcmp.ge.f32.partialorder %v465, 0.0
        %v506 = vsub.f32 0.0, %v502
        %v507 = vsub.f32 0.0, %v503
        %v508 = vsel %vm504, %v502, %v506
        %v509 = vsel %vm505, %v503, %v507
        %v510 = vadd.f32 %v508, 1.0
        %v511 = vadd.f32 %v509, 1.0
        %v512 = vmul.f32 %v462, %v510
        %v513 = vmul.f32 %v463, %v511
        %v514 = vld [vmem:[#allocation2] sm:$0xff]
        %v515 = vpack.c.bf16 %v512, %v512
        %v516 = vpack.c.bf16 %v513, %v513
        %v517 = vld [vmem:[#allocation9] sm:$0xf]
        %v518 = vld [vmem:[#allocation9 + $0x4] sm:$0xf]
        %v519 = vld [vmem:[#allocation9 + $0x8] sm:$0xf]
        %v520 = vld [vmem:[#allocation9 + $0xc] sm:$0xf]
        %v521 = vld [vmem:[#allocation9 + $0x10] sm:$0xf]
        %v522 = vld [vmem:[#allocation9 + $0x14] sm:$0xf]
        %v523 = vld [vmem:[#allocation9 + $0x18] sm:$0xf]
        %v524 = vld [vmem:[#allocation9 + $0x1c] sm:$0xf]
        %v525 = vld [vmem:[#allocation9 + $0x20] sm:$0xf]
        %v526 = vld [vmem:[#allocation9 + $0x24] sm:$0xf]
        %v527 = vld [vmem:[#allocation9 + $0x28] sm:$0xf]
        %v528 = vld [vmem:[#allocation9 + $0x2c] sm:$0xf]
        %v529 = vld [vmem:[#allocation9 + $0x30] sm:$0xf]
        %v530 = vld [vmem:[#allocation9 + $0x34] sm:$0xf]
        %v531 = vld [vmem:[#allocation9 + $0x38] sm:$0xf]
        %v532 = vld [vmem:[#allocation9 + $0x3c] sm:$0xf]
        %v533 = vld [vmem:[#allocation9 + $0x40] sm:$0xf]
        %v534 = vld [vmem:[#allocation9 + $0x44] sm:$0xf]
        %v535 = vld [vmem:[#allocation9 + $0x48] sm:$0xf]
        %v536 = vld [vmem:[#allocation9 + $0x4c] sm:$0xf]
        %v537 = vld [vmem:[#allocation9 + $0x50] sm:$0xf]
        %v538 = vld [vmem:[#allocation9 + $0x54] sm:$0xf]
        %v539 = vld [vmem:[#allocation9 + $0x58] sm:$0xf]
        %v540 = vld [vmem:[#allocation9 + $0x5c] sm:$0xf]
        %v541 = vld [vmem:[#allocation9 + $0x60] sm:$0xf]
        %v542 = vld [vmem:[#allocation9 + $0x64] sm:$0xf]
        %v543 = vld [vmem:[#allocation9 + $0x68] sm:$0xf]
        %v544 = vld [vmem:[#allocation9 + $0x6c] sm:$0xf]
        %v545 = vld [vmem:[#allocation9 + $0x70] sm:$0xf]
        %v546 = vld [vmem:[#allocation9 + $0x74] sm:$0xf]
        %v547 = vld [vmem:[#allocation9 + $0x78] sm:$0xf]
        %v548 = vld [vmem:[#allocation9 + $0x7c] sm:$0xf]
        %v581 = vunpack.c.l.b16 %v517
        %v582 = vunpack.c.l.b16 %v518
        %v583 = vunpack.c.l.b16 %v519
        %v584 = vunpack.c.l.b16 %v520
        %v585 = vunpack.c.l.b16 %v521
        %v586 = vunpack.c.l.b16 %v522
        %v587 = vunpack.c.l.b16 %v523
        %v588 = vunpack.c.l.b16 %v524
        %v589 = vunpack.c.l.b16 %v525
        %v590 = vunpack.c.l.b16 %v526
        %v591 = vunpack.c.l.b16 %v527
        %v592 = vunpack.c.l.b16 %v528
        %v593 = vunpack.c.l.b16 %v529
        %v594 = vunpack.c.l.b16 %v530
        %v595 = vunpack.c.l.b16 %v531
        %v596 = vunpack.c.l.b16 %v532
        %v597 = vunpack.c.l.b16 %v533
        %v598 = vunpack.c.l.b16 %v534
        %v599 = vunpack.c.l.b16 %v535
        %v600 = vunpack.c.l.b16 %v536
        %v601 = vunpack.c.l.b16 %v537
        %v602 = vunpack.c.l.b16 %v538
        %v603 = vunpack.c.l.b16 %v539
        %v604 = vunpack.c.l.b16 %v540
        %v605 = vunpack.c.l.b16 %v541
        %v606 = vunpack.c.l.b16 %v542
        %v607 = vunpack.c.l.b16 %v543
        %v608 = vunpack.c.l.b16 %v544
        %v609 = vunpack.c.l.b16 %v545
        %v610 = vunpack.c.l.b16 %v546
        %v611 = vunpack.c.l.b16 %v547
        %v612 = vunpack.c.l.b16 %v548
        %v613 = vpack.c.b16 %v582, %v581
        %v614 = vpack.c.b16 %v584, %v583
        %v615 = vpack.c.b16 %v586, %v585
        %v616 = vpack.c.b16 %v588, %v587
        %v617 = vpack.c.b16 %v590, %v589
        %v618 = vpack.c.b16 %v592, %v591
        %v619 = vpack.c.b16 %v594, %v593
        %v620 = vpack.c.b16 %v596, %v595
        %v621 = vpack.c.b16 %v598, %v597
        %v622 = vpack.c.b16 %v600, %v599
        %v623 = vpack.c.b16 %v602, %v601
        %v624 = vpack.c.b16 %v604, %v603
        %v625 = vpack.c.b16 %v606, %v605
        %v626 = vpack.c.b16 %v608, %v607
        %v627 = vpack.c.b16 %v610, %v609
        %v628 = vpack.c.b16 %v612, %v611
        %645 = vmatpush.bf16.msra.mxu0 %v620
        %646 = vmatpush.bf16.msra.mxu0 %v619
        %647 = vmatpush.bf16.msra.mxu0 %v618
        %648 = vmatpush.bf16.msra.mxu0 %v617
        %649 = vmatpush.bf16.msra.mxu0 %v616
        %650 = vmatpush.bf16.msra.mxu0 %v615
        %651 = vmatpush.bf16.msra.mxu0 %v614
        %652 = vmatpush.bf16.msra.mxu0 %v613
        %653 = vmatmul.bf16.gmra.mxu0 %v515
        %v654 = vpop.f32.mrf.mxu0
        %v655 = vadd.f32 0.0, %v654
        %v656 = vpop.f32.mrf.mxu0
        %657 = vdwg.mxu0
        %658 = vmatpush.bf16.msra.mxu0 %v628
        %659 = vmatpush.bf16.msra.mxu0 %v627
        %660 = vmatpush.bf16.msra.mxu0 %v626
        %661 = vmatpush.bf16.msra.mxu0 %v625
        %662 = vmatpush.bf16.msra.mxu0 %v624
        %663 = vmatpush.bf16.msra.mxu0 %v623
        %664 = vmatpush.bf16.msra.mxu0 %v622
        %665 = vmatpush.bf16.msra.mxu0 %v621
        %666 = vmatmul.bf16.gmra.mxu0 %v516
        %v667 = vpop.f32.mrf.mxu0
        %v668 = vadd.f32 %v655, %v667
        %v669 = vpop.f32.mrf.mxu0
        %670 = vdwg.mxu0
        %v671 = vadd.f32 %v514, %v668
        %672 = vst [vmem:[#allocation2] sm:$0xff] %v671
        // Predicated region
        $region61: #{tpu_custom_call.1} parent=39 // pred_check
          %p673 = pneg %p328
        $region62: #{tpu_custom_call.1} parent=39 // pred_check_branch
          %675 = sbr.rel (%p673) target = $region64
        $region63: #{tpu_custom_call.1} parent=39 // pred_region
          %v676 = vld [vmem:[#allocation2] sm:$0xff]
          %v677 = vld [vmem:[%s4] sm:$0x1]
          %v679 = vperm.slane %v677, 0
          %v681 = vadd.f32 %v676, %v679
          %682 = vst [vmem:[%s324] sm:$0xff] %v681
        $region64: #{tpu_custom_call.1} parent=39 // pred_fallthru
          _
        %s683 = sand.u32 %s169, 1
        %s684 = scalar_lea.sflag [#allocation5], %s683
        %s685 = sand.u32 %s169, 1
        %s686 = smul.addr %s685, 8
        %s687 = scalar_lea.vmem [#allocation11], %s686
        // Predicated region
        $region65: #{tpu_custom_call.1} parent=39 // pred_check
          %p688 = pneg %p179
        $region66: #{tpu_custom_call.1} parent=39 // pred_check_branch
          %690 = sbr.rel (%p688) target = $region68
        $region67: #{tpu_custom_call.1} parent=39 // pred_region
          %692 = vsyncadd %s684, 0
          %s693 = smul.addr %s28, 8
          %s694 = scalar_lea.hbm %s5, %s693
          %s696 = sshll.u32 %s687, 4
          %s697 = int_to_ptr.vmem [resolvable:$true] %s696
          %s698 = sshll.u32 %s694, 4
          %s699 = int_to_ptr.hbm [resolvable:$true] %s698
          %701 = dma.vmem_to_hbm [thread:$0]  %s697, 128, %s699, %s684
        $region68: #{tpu_custom_call.1} parent=39 // pred_fallthru
          _
      $region40: #{tpu_custom_call.1} parent=5 // pred_fallthru
        _
      %p702 = scmp.le.s32.totalorder 2, %s19
      // Predicated region
      $region69: #{tpu_custom_call.1} parent=5 // pred_check
        %p703 = pneg %p702
      $region70: #{tpu_custom_call.1} parent=5 // pred_check_branch
        %705 = sbr.rel (%p703) target = $region72
      $region71: #{tpu_custom_call.1} parent=5 // pred_region
        %s706 = ssub.s32 %s19, 2
        // Predicated region
        $region73: #{tpu_custom_call.1} parent=71 // pred_check
          %p707 = pneg %p185
        $region74: #{tpu_custom_call.1} parent=71 // pred_check_branch
          %709 = sbr.rel (%p707) target = $region76
        $region75: #{tpu_custom_call.1} parent=71 // pred_region
          %s710 = sand.u32 %s170, 1
          %s711 = scalar_lea.sflag [#allocation5], %s710
          %s712 = sand.u32 %s170, 1
          %s713 = smul.addr %s712, 8
          %s714 = scalar_lea.vmem [#allocation11], %s713
          %716 = dma.done %s711, 128
        $region76: #{tpu_custom_call.1} parent=71 // pred_fallthru
          _
      $region72: #{tpu_custom_call.1} parent=5 // pred_fallthru
        _
    $region6: #{tpu_custom_call.1} parent=1 // loop_footer
      %s23 = sadd.s32 1, %s19
    $region7: #{tpu_custom_call.1} parent=1 // loop_footer_branch
      %18 = sbr.rel target = $region3
    $region8: #{tpu_custom_call.1} parent=1 // loop_exit
      _
    %717 = vsyncpa [#allocation4], 1
    %s718 = scalar_lea.sflag [#allocation4], 1
    %719 = vsyncpa %s718, 1
    %720 = vsyncpa [#allocation7], 1
    %721 = vsyncpa [#allocation10], 1
    %722 = vsyncpa [#allocation5], 1
    %s723 = scalar_lea.sflag [#allocation5], 1
    %724 = vsyncpa %s723, 1

</llo_original>
